<compile_context>
chip_gen: v6e
topology: v6e:2x2x1
jax: 0.10.0
libtpu: 0.0.40
codegen_flags: <defaults>
</compile_context>

<pallas_src>
import jax
import jax.numpy as jnp
from jax.experimental import pallas as pl
from jax.experimental.pallas import tpu as pltpu


LANE_G = 128  # padded lane extent of one (p, q, rho, sigma) phase group (56*n <= 128)


# --------------------------------------------------------------------------- #
# XLA glue: transposed, phase-grouped im2col for conv1 (pure layout on the 8KB input)
# --------------------------------------------------------------------------- #
def _conv1_patches_T(x):
    """conv1 im2col, transposed and grouped by (pool-phase p,q) x (h1-phase rho,sigma).

    Returns (25, 16*LANE_G) bf16.  Row = kh*5 + kw.
    Column = g*LANE_G + (a'*8 + b')*n + batch, with group g = ((p*2+q)*2+rho)*2+sigma,
    value = x[batch, 4a' + (2rho+p) + kh, 4b' + (2sig+q) + kw]  (width zero-padded 32->36;
    the last LANE_G - 56n columns of each group are zero).
    """
    n = x.shape[0]
    lane = 56 * n
    xp = jnp.pad(x[:, 0], ((0, 0), (0, 0), (0, 4)))            # (n, 32, 36)
    # wd[dh][dw][b, a', b'] = xp[b, 4a'+dh, 4b'+dw]  -- static strided slices, no gather HLO
    wd = [[xp[:, dh:dh + 25:4, dw:dw + 29:4] for dw in range(8)] for dh in range(8)]
    groups = []
    for p in range(2):
        for q in range(2):
            for rho in range(2):
                for sig in range(2):
                    a0, b0 = 2 * rho + p, 2 * sig + q
                    g = jnp.stack([wd[a0 + kh][b0 + kw]
                                   for kh in range(5) for kw in range(5)], axis=0)  # (25,n,7,8)
                    g = jnp.transpose(g, (0, 2, 3, 1)).reshape(25, lane)  # cols (a',b',batch)
                    groups.append(jnp.pad(g, ((0, 0), (0, LANE_G - lane))))
    return jnp.concatenate(groups, axis=1).astype(jnp.bfloat16)           # (25, 16*LANE_G)


# --------------------------------------------------------------------------- #
# Fully fused forward pass (single grid-less pallas_call, no scratch)
# --------------------------------------------------------------------------- #
def net_forward(x, params):
    n = x.shape[0]
    assert 56 * n <= LANE_G, "this small-batch kernel assumes 56*batch <= 128"
    p1 = _conv1_patches_T(x)                       # (25, 16*LANE_G) bf16

    def kernel(p1_ref, w1_ref, b1_ref, w2_ref, b2_ref,
               f1w_ref, f1b_ref, f2w_ref, f2b_ref, f3w_ref, f3b_ref, o_ref):
        G = 4 * LANE_G                             # lanes per (p,q) super-block

        # ---- conv1: single GEMM, channels on sublanes ---------------------- #
        z1 = jnp.dot(w1_ref[...], p1_ref[...],
                     preferred_element_type=jnp.float32)        # (8, 4G)
        # 2x2 max-pool = elementwise max over the four 128-aligned (p,q) super-blocks,
        # then bias+relu (relu(max(z)+b) == max(relu(z+b))).
        m1 = jnp.maximum(jnp.maximum(z1[:, 0 * G:1 * G], z1[:, 1 * G:2 * G]),
                         jnp.maximum(z1[:, 2 * G:3 * G], z1[:, 3 * G:4 * G]))
        h1 = jnp.maximum(m1 + b1_ref[...], 0.0)                 # (8, G) f32
        # zero tail so the 128-wide conv2 slices below never run out of bounds
        h1b = jnp.concatenate(
            [h1.astype(jnp.bfloat16), jnp.zeros((8, LANE_G), jnp.bfloat16)], axis=1)

        # ---- conv2: per pool phase, im2col LHS assembled in registers ------ #
        def conv2_phase(r, s):
            pieces = []
            for kh in range(5):
                for kw in range(5):
                    rho, c = (r + kh) % 2, (r + kh) // 2
                    sig, d = (s + kw) % 2, (s + kw) // 2
                    off = (rho * 2 + sig) * LANE_G + (c * 8 + d) * n
                    pieces.append(h1b[:, off:off + LANE_G])     # (8, 128) bf16
            lhs = jnp.concatenate(pieces, axis=0)               # (200, 128) rows=(kh,kw,cin)
            return jnp.dot(w2_ref[...], lhs,
                           preferred_element_type=jnp.float32)  # (16, 128)

        z00 = conv2_phase(0, 0)
        z01 = conv2_phase(0, 1)
        z10 = conv2_phase(1, 0)
        z11 = conv2_phase(1, 1)
        m2 = jnp.maximum(jnp.maximum(z00, z01), jnp.maximum(z10, z11))
        h2 = jnp.maximum(m2 + b2_ref[...], 0.0)                 # (16, 128), lane=(t*8+u)*n+b
        h2b = h2.astype(jnp.bfloat16)

        # ---- flatten -> featT (400, n): rows (t, u, cout), cols = batch ----- #
        feat = jnp.concatenate(
            [h2b[:, (t * 8 + u) * n:(t * 8 + u) * n + n]
             for t in range(5) for u in range(5)], axis=0)      # (400, n) bf16

        # ---- FC head, transposed (outputs on sublanes, batch on lanes) ------ #
        a1 = jnp.maximum(
            jnp.dot(f1w_ref[...], feat, preferred_element_type=jnp.float32)
            + f1b_ref[...], 0.0)                                # (128, n)
        a2 = jnp.maximum(
            jnp.dot(f2w_ref[...], a1.astype(jnp.bfloat16),
                    preferred_element_type=jnp.float32) + f2b_ref[...], 0.0)   # (128, n)
        logits = jnp.dot(f3w_ref[...], a2.astype(jnp.bfloat16),
                         preferred_element_type=jnp.float32) + f3b_ref[...]    # (10, n)

        # ---- softmax over the class (sublane) axis -------------------------- #
        zc = logits - jnp.max(logits, axis=0, keepdims=True)
        e = jnp.exp(zc)
        o_ref[...] = e * pl.reciprocal(jnp.sum(e, axis=0, keepdims=True), approx=True)

    vm = pl.BlockSpec(memory_space=pltpu.MemorySpace.VMEM)
    out_t = pl.pallas_call(
        kernel,
        out_shape=jax.ShapeDtypeStruct((10, n), jnp.float32),
        in_specs=[vm] * 11,
        out_specs=vm,
    )(p1, params["w1"], params["b1"], params["w2"], params["b2"],
      params["f1w"], params["f1b"], params["f2w"], params["f2b"],
      params["f3w"], params["f3b"])
    return out_t.T                                              # (n, 10)


# --------------------------------------------------------------------------- #
# Parameter init (PyTorch-default-like uniform) + kernel-friendly repacking
# --------------------------------------------------------------------------- #
def init_params(key):
    def u(k, shape, fan_in):
        b = 1.0 / (fan_in ** 0.5)
        return jax.random.uniform(k, shape, jnp.float32, -b, b)

    ks = jax.random.split(key, 10)
    conv1_w = u(ks[0], (6, 1, 5, 5), 25)
    conv1_b = u(ks[1], (6,), 25)
    conv2_w = u(ks[2], (16, 6, 5, 5), 150)
    conv2_b = u(ks[3], (16,), 150)
    fc1_w = u(ks[4], (120, 400), 400)
    fc1_b = u(ks[5], (120,), 400)
    fc2_w = u(ks[6], (84, 120), 120)
    fc2_b = u(ks[7], (84,), 120)
    fc3_w = u(ks[8], (10, 84), 84)
    fc3_b = u(ks[9], (10,), 84)

    raw = dict(conv1_w=conv1_w, conv1_b=conv1_b, conv2_w=conv2_w, conv2_b=conv2_b,
               fc1_w=fc1_w, fc1_b=fc1_b, fc2_w=fc2_w, fc2_b=fc2_b,
               fc3_w=fc3_w, fc3_b=fc3_b)

    # conv1: (cout, kh*kw) padded to 8 channel rows.
    w1 = jnp.pad(conv1_w.reshape(6, 25), ((0, 2), (0, 0))).astype(jnp.bfloat16)     # (8, 25)
    b1 = jnp.pad(conv1_b, (0, 2)).reshape(8, 1)
    # conv2: (cout, (kh,kw,cin)) with cin padded 6->8.
    w2 = jnp.transpose(conv2_w, (0, 2, 3, 1))                                       # (16,5,5,6)
    w2 = jnp.pad(w2, ((0, 0), (0, 0), (0, 0), (0, 2))).reshape(16, 200).astype(jnp.bfloat16)
    b2 = conv2_b.reshape(16, 1)
    # fc1: columns permuted from PyTorch's (c,t,u) flatten order to the kernel's (t,u,c);
    # output dim padded to 128.
    f1w = jnp.transpose(fc1_w.reshape(120, 16, 5, 5), (0, 2, 3, 1)).reshape(120, 400)
    f1w = jnp.pad(f1w, ((0, 8), (0, 0))).astype(jnp.bfloat16)                       # (128, 400)
    f1b = jnp.pad(fc1_b, (0, 8)).reshape(128, 1)
    f2w = jnp.pad(fc2_w, ((0, 44), (0, 8))).astype(jnp.bfloat16)                    # (128, 128)
    f2b = jnp.pad(fc2_b, (0, 44)).reshape(128, 1)
    f3w = jnp.pad(fc3_w, ((0, 0), (0, 44))).astype(jnp.bfloat16)                    # (10, 128)
    f3b = fc3_b.reshape(10, 1)

    packed = {"w1": w1, "b1": b1, "w2": w2, "b2": b2,
              "f1w": f1w, "f1b": f1b, "f2w": f2w, "f2b": f2b, "f3w": f3w, "f3b": f3b}
    return packed, raw


# --------------------------------------------------------------------------- #
# Pure-JAX f32 reference of the PyTorch module (sanity check)
# --------------------------------------------------------------------------- #
def reference_forward(x, raw):
    dn = ("NCHW", "OIHW", "NCHW")

    def pool(y):
        nb, c, h, w = y.shape
        return y.reshape(nb, c, h // 2, 2, w // 2, 2).max(axis=(3, 5))

    y = jax.lax.conv_general_dilated(x, raw["conv1_w"], (1, 1), "VALID", dimension_numbers=dn)
    y = pool(jnp.maximum(y + raw["conv1_b"][None, :, None, None], 0.0))
    y = jax.lax.conv_general_dilated(y, raw["conv2_w"], (1, 1), "VALID", dimension_numbers=dn)
    y = pool(jnp.maximum(y + raw["conv2_b"][None, :, None, None], 0.0))
    flat = y.reshape(y.shape[0], -1)
    a1 = jnp.maximum(flat @ raw["fc1_w"].T + raw["fc1_b"], 0.0)
    a2 = jnp.maximum(a1 @ raw["fc2_w"].T + raw["fc2_b"], 0.0)
    logits = a2 @ raw["fc3_w"].T + raw["fc3_b"]
    return jax.nn.softmax(logits, axis=-1)


if __name__ == "__main__":
    root = jax.random.PRNGKey(0)
    k_x, k_p = jax.random.split(root)
    x = jax.random.uniform(k_x, (2, 1, 32, 32), jnp.float32)   # like torch.rand(2,1,32,32)
    params, raw = init_params(k_p)

    fwd = jax.jit(net_forward)
    out = jax.block_until_ready(fwd(x, params))

    assert out.shape == (2, 10)
    row_sums = jnp.sum(out, axis=-1)
    assert bool(jnp.all(jnp.abs(row_sums - 1.0) < 1e-2))

    ref = reference_forward(x, raw)
    assert bool(jnp.max(jnp.abs(out - ref)) < 3e-2), "kernel output deviates from reference"

    print("KERNEL_OK")
</pallas_src>

<mosaic_0001>
module attributes {stable_mosaic.version = 11 : i64} {
  func.func @kernel(%arg0: memref<25x2048xbf16, #tpu.memory_space<vmem>>, %arg1: memref<8x25xbf16, #tpu.memory_space<vmem>>, %arg2: memref<8x1xf32, #tpu.memory_space<vmem>>, %arg3: memref<16x200xbf16, #tpu.memory_space<vmem>>, %arg4: memref<16x1xf32, #tpu.memory_space<vmem>>, %arg5: memref<128x400xbf16, #tpu.memory_space<vmem>>, %arg6: memref<128x1xf32, #tpu.memory_space<vmem>>, %arg7: memref<128x128xbf16, #tpu.memory_space<vmem>>, %arg8: memref<128x1xf32, #tpu.memory_space<vmem>>, %arg9: memref<10x128xbf16, #tpu.memory_space<vmem>>, %arg10: memref<10x1xf32, #tpu.memory_space<vmem>>, %arg11: memref<10x2xf32, #tpu.memory_space<vmem>>) attributes {dimension_semantics = [], scalar_prefetch = 0 : i64, scratch_operands = 0 : i64, tpu.core_type = #tpu.core_type<tc>} {
    %c0 = arith.constant 0 : index
    %c0_0 = arith.constant 0 : index
    %0 = vector.load %arg1[%c0, %c0_0] : memref<8x25xbf16, #tpu.memory_space<vmem>>, vector<8x25xbf16>
    %c0_1 = arith.constant 0 : index
    %c0_2 = arith.constant 0 : index
    %1 = vector.load %arg0[%c0_1, %c0_2] : memref<25x2048xbf16, #tpu.memory_space<vmem>>, vector<25x2048xbf16>
    %cst = arith.constant dense<0.000000e+00> : vector<8x2048xf32>
    %2 = tpu.matmul %0, %1, %cst {dimension_numbers = #tpu.dot_dimension_numbers<[1], [0], [0], [1], [0, 0, 1, 1], [], []>} : vector<8x25xbf16>, vector<25x2048xbf16>, vector<8x2048xf32> -> vector<8x2048xf32>
    %3 = vector.extract_strided_slice %2 {offsets = [0, 0], sizes = [8, 512], strides = [1, 1]} : vector<8x2048xf32> to vector<8x512xf32>
    %4 = vector.extract_strided_slice %2 {offsets = [0, 512], sizes = [8, 512], strides = [1, 1]} : vector<8x2048xf32> to vector<8x512xf32>
    %5 = arith.maximumf %3, %4 : vector<8x512xf32>
    %6 = vector.extract_strided_slice %2 {offsets = [0, 1024], sizes = [8, 512], strides = [1, 1]} : vector<8x2048xf32> to vector<8x512xf32>
    %7 = vector.extract_strided_slice %2 {offsets = [0, 1536], sizes = [8, 512], strides = [1, 1]} : vector<8x2048xf32> to vector<8x512xf32>
    %8 = arith.maximumf %6, %7 : vector<8x512xf32>
    %9 = arith.maximumf %5, %8 : vector<8x512xf32>
    %c0_3 = arith.constant 0 : index
    %c0_4 = arith.constant 0 : index
    %10 = vector.load %arg2[%c0_3, %c0_4] : memref<8x1xf32, #tpu.memory_space<vmem>>, vector<8x1xf32>
    %11 = vector.broadcast %10 : vector<8x1xf32> to vector<8x512xf32>
    %12 = arith.addf %9, %11 : vector<8x512xf32>
    %cst_5 = arith.constant 0.000000e+00 : f32
    %13 = vector.broadcast %cst_5 : f32 to vector<8x512xf32>
    %14 = arith.maximumf %12, %13 : vector<8x512xf32>
    %15 = arith.truncf %14 : vector<8x512xf32> to vector<8x512xbf16>
    %cst_6 = arith.constant 0.000000e+00 : bf16
    %16 = vector.broadcast %cst_6 : bf16 to vector<8x128xbf16>
    %17 = tpu.concatenate %15, %16 in 1 : vector<8x512xbf16>, vector<8x128xbf16> -> vector<8x640xbf16>
    %18 = vector.extract_strided_slice %17 {offsets = [0, 0], sizes = [8, 128], strides = [1, 1]} : vector<8x640xbf16> to vector<8x128xbf16>
    %19 = vector.extract_strided_slice %17 {offsets = [0, 128], sizes = [8, 128], strides = [1, 1]} : vector<8x640xbf16> to vector<8x128xbf16>
    %20 = vector.extract_strided_slice %17 {offsets = [0, 2], sizes = [8, 128], strides = [1, 1]} : vector<8x640xbf16> to vector<8x128xbf16>
    %21 = vector.extract_strided_slice %17 {offsets = [0, 130], sizes = [8, 128], strides = [1, 1]} : vector<8x640xbf16> to vector<8x128xbf16>
    %22 = vector.extract_strided_slice %17 {offsets = [0, 4], sizes = [8, 128], strides = [1, 1]} : vector<8x640xbf16> to vector<8x128xbf16>
    %23 = vector.extract_strided_slice %17 {offsets = [0, 256], sizes = [8, 128], strides = [1, 1]} : vector<8x640xbf16> to vector<8x128xbf16>
    %24 = vector.extract_strided_slice %17 {offsets = [0, 384], sizes = [8, 128], strides = [1, 1]} : vector<8x640xbf16> to vector<8x128xbf16>
    %25 = vector.extract_strided_slice %17 {offsets = [0, 258], sizes = [8, 128], strides = [1, 1]} : vector<8x640xbf16> to vector<8x128xbf16>
    %26 = vector.extract_strided_slice %17 {offsets = [0, 386], sizes = [8, 128], strides = [1, 1]} : vector<8x640xbf16> to vector<8x128xbf16>
    %27 = vector.extract_strided_slice %17 {offsets = [0, 260], sizes = [8, 128], strides = [1, 1]} : vector<8x640xbf16> to vector<8x128xbf16>
    %28 = vector.extract_strided_slice %17 {offsets = [0, 16], sizes = [8, 128], strides = [1, 1]} : vector<8x640xbf16> to vector<8x128xbf16>
    %29 = vector.extract_strided_slice %17 {offsets = [0, 144], sizes = [8, 128], strides = [1, 1]} : vector<8x640xbf16> to vector<8x128xbf16>
    %30 = vector.extract_strided_slice %17 {offsets = [0, 18], sizes = [8, 128], strides = [1, 1]} : vector<8x640xbf16> to vector<8x128xbf16>
    %31 = vector.extract_strided_slice %17 {offsets = [0, 146], sizes = [8, 128], strides = [1, 1]} : vector<8x640xbf16> to vector<8x128xbf16>
    %32 = vector.extract_strided_slice %17 {offsets = [0, 20], sizes = [8, 128], strides = [1, 1]} : vector<8x640xbf16> to vector<8x128xbf16>
    %33 = vector.extract_strided_slice %17 {offsets = [0, 272], sizes = [8, 128], strides = [1, 1]} : vector<8x640xbf16> to vector<8x128xbf16>
    %34 = vector.extract_strided_slice %17 {offsets = [0, 400], sizes = [8, 128], strides = [1, 1]} : vector<8x640xbf16> to vector<8x128xbf16>
    %35 = vector.extract_strided_slice %17 {offsets = [0, 274], sizes = [8, 128], strides = [1, 1]} : vector<8x640xbf16> to vector<8x128xbf16>
    %36 = vector.extract_strided_slice %17 {offsets = [0, 402], sizes = [8, 128], strides = [1, 1]} : vector<8x640xbf16> to vector<8x128xbf16>
    %37 = vector.extract_strided_slice %17 {offsets = [0, 276], sizes = [8, 128], strides = [1, 1]} : vector<8x640xbf16> to vector<8x128xbf16>
    %38 = vector.extract_strided_slice %17 {offsets = [0, 32], sizes = [8, 128], strides = [1, 1]} : vector<8x640xbf16> to vector<8x128xbf16>
    %39 = vector.extract_strided_slice %17 {offsets = [0, 160], sizes = [8, 128], strides = [1, 1]} : vector<8x640xbf16> to vector<8x128xbf16>
    %40 = vector.extract_strided_slice %17 {offsets = [0, 34], sizes = [8, 128], strides = [1, 1]} : vector<8x640xbf16> to vector<8x128xbf16>
    %41 = vector.extract_strided_slice %17 {offsets = [0, 162], sizes = [8, 128], strides = [1, 1]} : vector<8x640xbf16> to vector<8x128xbf16>
    %42 = vector.extract_strided_slice %17 {offsets = [0, 36], sizes = [8, 128], strides = [1, 1]} : vector<8x640xbf16> to vector<8x128xbf16>
    %43 = tpu.concatenate %18, %19, %20, %21, %22, %23, %24, %25, %26, %27, %28, %29, %30, %31, %32, %33 in 0 : vector<8x128xbf16>, vector<8x128xbf16>, vector<8x128xbf16>, vector<8x128xbf16>, vector<8x128xbf16>, vector<8x128xbf16>, vector<8x128xbf16>, vector<8x128xbf16>, vector<8x128xbf16>, vector<8x128xbf16>, vector<8x128xbf16>, vector<8x128xbf16>, vector<8x128xbf16>, vector<8x128xbf16>, vector<8x128xbf16>, vector<8x128xbf16> -> vector<128x128xbf16>
    %44 = tpu.concatenate %34, %35, %36, %37, %38, %39, %40, %41, %42 in 0 : vector<8x128xbf16>, vector<8x128xbf16>, vector<8x128xbf16>, vector<8x128xbf16>, vector<8x128xbf16>, vector<8x128xbf16>, vector<8x128xbf16>, vector<8x128xbf16>, vector<8x128xbf16> -> vector<72x128xbf16>
    %45 = tpu.concatenate %43, %44 in 0 : vector<128x128xbf16>, vector<72x128xbf16> -> vector<200x128xbf16>
    %c0_7 = arith.constant 0 : index
    %c0_8 = arith.constant 0 : index
    %46 = vector.load %arg3[%c0_7, %c0_8] : memref<16x200xbf16, #tpu.memory_space<vmem>>, vector<16x200xbf16>
    %cst_9 = arith.constant dense<0.000000e+00> : vector<16x128xf32>
    %47 = tpu.matmul %46, %45, %cst_9 {dimension_numbers = #tpu.dot_dimension_numbers<[1], [0], [0], [1], [0, 0, 1, 1], [], []>} : vector<16x200xbf16>, vector<200x128xbf16>, vector<16x128xf32> -> vector<16x128xf32>
    %48 = vector.extract_strided_slice %17 {offsets = [0, 128], sizes = [8, 128], strides = [1, 1]} : vector<8x640xbf16> to vector<8x128xbf16>
    %49 = vector.extract_strided_slice %17 {offsets = [0, 2], sizes = [8, 128], strides = [1, 1]} : vector<8x640xbf16> to vector<8x128xbf16>
    %50 = vector.extract_strided_slice %17 {offsets = [0, 130], sizes = [8, 128], strides = [1, 1]} : vector<8x640xbf16> to vector<8x128xbf16>
    %51 = vector.extract_strided_slice %17 {offsets = [0, 4], sizes = [8, 128], strides = [1, 1]} : vector<8x640xbf16> to vector<8x128xbf16>
    %52 = vector.extract_strided_slice %17 {offsets = [0, 132], sizes = [8, 128], strides = [1, 1]} : vector<8x640xbf16> to vector<8x128xbf16>
    %53 = vector.extract_strided_slice %17 {offsets = [0, 384], sizes = [8, 128], strides = [1, 1]} : vector<8x640xbf16> to vector<8x128xbf16>
    %54 = vector.extract_strided_slice %17 {offsets = [0, 258], sizes = [8, 128], strides = [1, 1]} : vector<8x640xbf16> to vector<8x128xbf16>
    %55 = vector.extract_strided_slice %17 {offsets = [0, 386], sizes = [8, 128], strides = [1, 1]} : vector<8x640xbf16> to vector<8x128xbf16>
    %56 = vector.extract_strided_slice %17 {offsets = [0, 260], sizes = [8, 128], strides = [1, 1]} : vector<8x640xbf16> to vector<8x128xbf16>
    %57 = vector.extract_strided_slice %17 {offsets = [0, 388], sizes = [8, 128], strides = [1, 1]} : vector<8x640xbf16> to vector<8x128xbf16>
    %58 = vector.extract_strided_slice %17 {offsets = [0, 144], sizes = [8, 128], strides = [1, 1]} : vector<8x640xbf16> to vector<8x128xbf16>
    %59 = vector.extract_strided_slice %17 {offsets = [0, 18], sizes = [8, 128], strides = [1, 1]} : vector<8x640xbf16> to vector<8x128xbf16>
    %60 = vector.extract_strided_slice %17 {offsets = [0, 146], sizes = [8, 128], strides = [1, 1]} : vector<8x640xbf16> to vector<8x128xbf16>
    %61 = vector.extract_strided_slice %17 {offsets = [0, 20], sizes = [8, 128], strides = [1, 1]} : vector<8x640xbf16> to vector<8x128xbf16>
    %62 = vector.extract_strided_slice %17 {offsets = [0, 148], sizes = [8, 128], strides = [1, 1]} : vector<8x640xbf16> to vector<8x128xbf16>
    %63 = vector.extract_strided_slice %17 {offsets = [0, 400], sizes = [8, 128], strides = [1, 1]} : vector<8x640xbf16> to vector<8x128xbf16>
    %64 = vector.extract_strided_slice %17 {offsets = [0, 274], sizes = [8, 128], strides = [1, 1]} : vector<8x640xbf16> to vector<8x128xbf16>
    %65 = vector.extract_strided_slice %17 {offsets = [0, 402], sizes = [8, 128], strides = [1, 1]} : vector<8x640xbf16> to vector<8x128xbf16>
    %66 = vector.extract_strided_slice %17 {offsets = [0, 276], sizes = [8, 128], strides = [1, 1]} : vector<8x640xbf16> to vector<8x128xbf16>
    %67 = vector.extract_strided_slice %17 {offsets = [0, 404], sizes = [8, 128], strides = [1, 1]} : vector<8x640xbf16> to vector<8x128xbf16>
    %68 = vector.extract_strided_slice %17 {offsets = [0, 160], sizes = [8, 128], strides = [1, 1]} : vector<8x640xbf16> to vector<8x128xbf16>
    %69 = vector.extract_strided_slice %17 {offsets = [0, 34], sizes = [8, 128], strides = [1, 1]} : vector<8x640xbf16> to vector<8x128xbf16>
    %70 = vector.extract_strided_slice %17 {offsets = [0, 162], sizes = [8, 128], strides = [1, 1]} : vector<8x640xbf16> to vector<8x128xbf16>
    %71 = vector.extract_strided_slice %17 {offsets = [0, 36], sizes = [8, 128], strides = [1, 1]} : vector<8x640xbf16> to vector<8x128xbf16>
    %72 = vector.extract_strided_slice %17 {offsets = [0, 164], sizes = [8, 128], strides = [1, 1]} : vector<8x640xbf16> to vector<8x128xbf16>
    %73 = tpu.concatenate %48, %49, %50, %51, %52, %53, %54, %55, %56, %57, %58, %59, %60, %61, %62, %63 in 0 : vector<8x128xbf16>, vector<8x128xbf16>, vector<8x128xbf16>, vector<8x128xbf16>, vector<8x128xbf16>, vector<8x128xbf16>, vector<8x128xbf16>, vector<8x128xbf16>, vector<8x128xbf16>, vector<8x128xbf16>, vector<8x128xbf16>, vector<8x128xbf16>, vector<8x128xbf16>, vector<8x128xbf16>, vector<8x128xbf16>, vector<8x128xbf16> -> vector<128x128xbf16>
    %74 = tpu.concatenate %64, %65, %66, %67, %68, %69, %70, %71, %72 in 0 : vector<8x128xbf16>, vector<8x128xbf16>, vector<8x128xbf16>, vector<8x128xbf16>, vector<8x128xbf16>, vector<8x128xbf16>, vector<8x128xbf16>, vector<8x128xbf16>, vector<8x128xbf16> -> vector<72x128xbf16>
    %75 = tpu.concatenate %73, %74 in 0 : vector<128x128xbf16>, vector<72x128xbf16> -> vector<200x128xbf16>
    %c0_10 = arith.constant 0 : index
    %c0_11 = arith.constant 0 : index
    %76 = vector.load %arg3[%c0_10, %c0_11] : memref<16x200xbf16, #tpu.memory_space<vmem>>, vector<16x200xbf16>
    %cst_12 = arith.constant dense<0.000000e+00> : vector<16x128xf32>
    %77 = tpu.matmul %76, %75, %cst_12 {dimension_numbers = #tpu.dot_dimension_numbers<[1], [0], [0], [1], [0, 0, 1, 1], [], []>} : vector<16x200xbf16>, vector<200x128xbf16>, vector<16x128xf32> -> vector<16x128xf32>
    %78 = vector.extract_strided_slice %17 {offsets = [0, 256], sizes = [8, 128], strides = [1, 1]} : vector<8x640xbf16> to vector<8x128xbf16>
    %79 = vector.extract_strided_slice %17 {offsets = [0, 384], sizes = [8, 128], strides = [1, 1]} : vector<8x640xbf16> to vector<8x128xbf16>
    %80 = vector.extract_strided_slice %17 {offsets = [0, 258], sizes = [8, 128], strides = [1, 1]} : vector<8x640xbf16> to vector<8x128xbf16>
    %81 = vector.extract_strided_slice %17 {offsets = [0, 386], sizes = [8, 128], strides = [1, 1]} : vector<8x640xbf16> to vector<8x128xbf16>
    %82 = vector.extract_strided_slice %17 {offsets = [0, 260], sizes = [8, 128], strides = [1, 1]} : vector<8x640xbf16> to vector<8x128xbf16>
    %83 = vector.extract_strided_slice %17 {offsets = [0, 16], sizes = [8, 128], strides = [1, 1]} : vector<8x640xbf16> to vector<8x128xbf16>
    %84 = vector.extract_strided_slice %17 {offsets = [0, 144], sizes = [8, 128], strides = [1, 1]} : vector<8x640xbf16> to vector<8x128xbf16>
    %85 = vector.extract_strided_slice %17 {offsets = [0, 18], sizes = [8, 128], strides = [1, 1]} : vector<8x640xbf16> to vector<8x128xbf16>
    %86 = vector.extract_strided_slice %17 {offsets = [0, 146], sizes = [8, 128], strides = [1, 1]} : vector<8x640xbf16> to vector<8x128xbf16>
    %87 = vector.extract_strided_slice %17 {offsets = [0, 20], sizes = [8, 128], strides = [1, 1]} : vector<8x640xbf16> to vector<8x128xbf16>
    %88 = vector.extract_strided_slice %17 {offsets = [0, 272], sizes = [8, 128], strides = [1, 1]} : vector<8x640xbf16> to vector<8x128xbf16>
    %89 = vector.extract_strided_slice %17 {offsets = [0, 400], sizes = [8, 128], strides = [1, 1]} : vector<8x640xbf16> to vector<8x128xbf16>
    %90 = vector.extract_strided_slice %17 {offsets = [0, 274], sizes = [8, 128], strides = [1, 1]} : vector<8x640xbf16> to vector<8x128xbf16>
    %91 = vector.extract_strided_slice %17 {offsets = [0, 402], sizes = [8, 128], strides = [1, 1]} : vector<8x640xbf16> to vector<8x128xbf16>
    %92 = vector.extract_strided_slice %17 {offsets = [0, 276], sizes = [8, 128], strides = [1, 1]} : vector<8x640xbf16> to vector<8x128xbf16>
    %93 = vector.extract_strided_slice %17 {offsets = [0, 32], sizes = [8, 128], strides = [1, 1]} : vector<8x640xbf16> to vector<8x128xbf16>
    %94 = vector.extract_strided_slice %17 {offsets = [0, 160], sizes = [8, 128], strides = [1, 1]} : vector<8x640xbf16> to vector<8x128xbf16>
    %95 = vector.extract_strided_slice %17 {offsets = [0, 34], sizes = [8, 128], strides = [1, 1]} : vector<8x640xbf16> to vector<8x128xbf16>
    %96 = vector.extract_strided_slice %17 {offsets = [0, 162], sizes = [8, 128], strides = [1, 1]} : vector<8x640xbf16> to vector<8x128xbf16>
    %97 = vector.extract_strided_slice %17 {offsets = [0, 36], sizes = [8, 128], strides = [1, 1]} : vector<8x640xbf16> to vector<8x128xbf16>
    %98 = vector.extract_strided_slice %17 {offsets = [0, 288], sizes = [8, 128], strides = [1, 1]} : vector<8x640xbf16> to vector<8x128xbf16>
    %99 = vector.extract_strided_slice %17 {offsets = [0, 416], sizes = [8, 128], strides = [1, 1]} : vector<8x640xbf16> to vector<8x128xbf16>
    %100 = vector.extract_strided_slice %17 {offsets = [0, 290], sizes = [8, 128], strides = [1, 1]} : vector<8x640xbf16> to vector<8x128xbf16>
    %101 = vector.extract_strided_slice %17 {offsets = [0, 418], sizes = [8, 128], strides = [1, 1]} : vector<8x640xbf16> to vector<8x128xbf16>
    %102 = vector.extract_strided_slice %17 {offsets = [0, 292], sizes = [8, 128], strides = [1, 1]} : vector<8x640xbf16> to vector<8x128xbf16>
    %103 = tpu.concatenate %78, %79, %80, %81, %82, %83, %84, %85, %86, %87, %88, %89, %90, %91, %92, %93 in 0 : vector<8x128xbf16>, vector<8x128xbf16>, vector<8x128xbf16>, vector<8x128xbf16>, vector<8x128xbf16>, vector<8x128xbf16>, vector<8x128xbf16>, vector<8x128xbf16>, vector<8x128xbf16>, vector<8x128xbf16>, vector<8x128xbf16>, vector<8x128xbf16>, vector<8x128xbf16>, vector<8x128xbf16>, vector<8x128xbf16>, vector<8x128xbf16> -> vector<128x128xbf16>
    %104 = tpu.concatenate %94, %95, %96, %97, %98, %99, %100, %101, %102 in 0 : vector<8x128xbf16>, vector<8x128xbf16>, vector<8x128xbf16>, vector<8x128xbf16>, vector<8x128xbf16>, vector<8x128xbf16>, vector<8x128xbf16>, vector<8x128xbf16>, vector<8x128xbf16> -> vector<72x128xbf16>
    %105 = tpu.concatenate %103, %104 in 0 : vector<128x128xbf16>, vector<72x128xbf16> -> vector<200x128xbf16>
    %c0_13 = arith.constant 0 : index
    %c0_14 = arith.constant 0 : index
    %106 = vector.load %arg3[%c0_13, %c0_14] : memref<16x200xbf16, #tpu.memory_space<vmem>>, vector<16x200xbf16>
    %cst_15 = arith.constant dense<0.000000e+00> : vector<16x128xf32>
    %107 = tpu.matmul %106, %105, %cst_15 {dimension_numbers = #tpu.dot_dimension_numbers<[1], [0], [0], [1], [0, 0, 1, 1], [], []>} : vector<16x200xbf16>, vector<200x128xbf16>, vector<16x128xf32> -> vector<16x128xf32>
    %108 = vector.extract_strided_slice %17 {offsets = [0, 384], sizes = [8, 128], strides = [1, 1]} : vector<8x640xbf16> to vector<8x128xbf16>
    %109 = vector.extract_strided_slice %17 {offsets = [0, 258], sizes = [8, 128], strides = [1, 1]} : vector<8x640xbf16> to vector<8x128xbf16>
    %110 = vector.extract_strided_slice %17 {offsets = [0, 386], sizes = [8, 128], strides = [1, 1]} : vector<8x640xbf16> to vector<8x128xbf16>
    %111 = vector.extract_strided_slice %17 {offsets = [0, 260], sizes = [8, 128], strides = [1, 1]} : vector<8x640xbf16> to vector<8x128xbf16>
    %112 = vector.extract_strided_slice %17 {offsets = [0, 388], sizes = [8, 128], strides = [1, 1]} : vector<8x640xbf16> to vector<8x128xbf16>
    %113 = vector.extract_strided_slice %17 {offsets = [0, 144], sizes = [8, 128], strides = [1, 1]} : vector<8x640xbf16> to vector<8x128xbf16>
    %114 = vector.extract_strided_slice %17 {offsets = [0, 18], sizes = [8, 128], strides = [1, 1]} : vector<8x640xbf16> to vector<8x128xbf16>
    %115 = vector.extract_strided_slice %17 {offsets = [0, 146], sizes = [8, 128], strides = [1, 1]} : vector<8x640xbf16> to vector<8x128xbf16>
    %116 = vector.extract_strided_slice %17 {offsets = [0, 20], sizes = [8, 128], strides = [1, 1]} : vector<8x640xbf16> to vector<8x128xbf16>
    %117 = vector.extract_strided_slice %17 {offsets = [0, 148], sizes = [8, 128], strides = [1, 1]} : vector<8x640xbf16> to vector<8x128xbf16>
    %118 = vector.extract_strided_slice %17 {offsets = [0, 400], sizes = [8, 128], strides = [1, 1]} : vector<8x640xbf16> to vector<8x128xbf16>
    %119 = vector.extract_strided_slice %17 {offsets = [0, 274], sizes = [8, 128], strides = [1, 1]} : vector<8x640xbf16> to vector<8x128xbf16>
    %120 = vector.extract_strided_slice %17 {offsets = [0, 402], sizes = [8, 128], strides = [1, 1]} : vector<8x640xbf16> to vector<8x128xbf16>
    %121 = vector.extract_strided_slice %17 {offsets = [0, 276], sizes = [8, 128], strides = [1, 1]} : vector<8x640xbf16> to vector<8x128xbf16>
    %122 = vector.extract_strided_slice %17 {offsets = [0, 404], sizes = [8, 128], strides = [1, 1]} : vector<8x640xbf16> to vector<8x128xbf16>
    %123 = vector.extract_strided_slice %17 {offsets = [0, 160], sizes = [8, 128], strides = [1, 1]} : vector<8x640xbf16> to vector<8x128xbf16>
    %124 = vector.extract_strided_slice %17 {offsets = [0, 34], sizes = [8, 128], strides = [1, 1]} : vector<8x640xbf16> to vector<8x128xbf16>
    %125 = vector.extract_strided_slice %17 {offsets = [0, 162], sizes = [8, 128], strides = [1, 1]} : vector<8x640xbf16> to vector<8x128xbf16>
    %126 = vector.extract_strided_slice %17 {offsets = [0, 36], sizes = [8, 128], strides = [1, 1]} : vector<8x640xbf16> to vector<8x128xbf16>
    %127 = vector.extract_strided_slice %17 {offsets = [0, 164], sizes = [8, 128], strides = [1, 1]} : vector<8x640xbf16> to vector<8x128xbf16>
    %128 = vector.extract_strided_slice %17 {offsets = [0, 416], sizes = [8, 128], strides = [1, 1]} : vector<8x640xbf16> to vector<8x128xbf16>
    %129 = vector.extract_strided_slice %17 {offsets = [0, 290], sizes = [8, 128], strides = [1, 1]} : vector<8x640xbf16> to vector<8x128xbf16>
    %130 = vector.extract_strided_slice %17 {offsets = [0, 418], sizes = [8, 128], strides = [1, 1]} : vector<8x640xbf16> to vector<8x128xbf16>
    %131 = vector.extract_strided_slice %17 {offsets = [0, 292], sizes = [8, 128], strides = [1, 1]} : vector<8x640xbf16> to vector<8x128xbf16>
    %132 = vector.extract_strided_slice %17 {offsets = [0, 420], sizes = [8, 128], strides = [1, 1]} : vector<8x640xbf16> to vector<8x128xbf16>
    %133 = tpu.concatenate %108, %109, %110, %111, %112, %113, %114, %115, %116, %117, %118, %119, %120, %121, %122, %123 in 0 : vector<8x128xbf16>, vector<8x128xbf16>, vector<8x128xbf16>, vector<8x128xbf16>, vector<8x128xbf16>, vector<8x128xbf16>, vector<8x128xbf16>, vector<8x128xbf16>, vector<8x128xbf16>, vector<8x128xbf16>, vector<8x128xbf16>, vector<8x128xbf16>, vector<8x128xbf16>, vector<8x128xbf16>, vector<8x128xbf16>, vector<8x128xbf16> -> vector<128x128xbf16>
    %134 = tpu.concatenate %124, %125, %126, %127, %128, %129, %130, %131, %132 in 0 : vector<8x128xbf16>, vector<8x128xbf16>, vector<8x128xbf16>, vector<8x128xbf16>, vector<8x128xbf16>, vector<8x128xbf16>, vector<8x128xbf16>, vector<8x128xbf16>, vector<8x128xbf16> -> vector<72x128xbf16>
    %135 = tpu.concatenate %133, %134 in 0 : vector<128x128xbf16>, vector<72x128xbf16> -> vector<200x128xbf16>
    %c0_16 = arith.constant 0 : index
    %c0_17 = arith.constant 0 : index
    %136 = vector.load %arg3[%c0_16, %c0_17] : memref<16x200xbf16, #tpu.memory_space<vmem>>, vector<16x200xbf16>
    %cst_18 = arith.constant dense<0.000000e+00> : vector<16x128xf32>
    %137 = tpu.matmul %136, %135, %cst_18 {dimension_numbers = #tpu.dot_dimension_numbers<[1], [0], [0], [1], [0, 0, 1, 1], [], []>} : vector<16x200xbf16>, vector<200x128xbf16>, vector<16x128xf32> -> vector<16x128xf32>
    %138 = arith.maximumf %47, %77 : vector<16x128xf32>
    %139 = arith.maximumf %107, %137 : vector<16x128xf32>
    %140 = arith.maximumf %138, %139 : vector<16x128xf32>
    %c0_19 = arith.constant 0 : index
    %c0_20 = arith.constant 0 : index
    %141 = vector.load %arg4[%c0_19, %c0_20] : memref<16x1xf32, #tpu.memory_space<vmem>>, vector<16x1xf32>
    %142 = vector.broadcast %141 : vector<16x1xf32> to vector<16x128xf32>
    %143 = arith.addf %140, %142 : vector<16x128xf32>
    %cst_21 = arith.constant 0.000000e+00 : f32
    %144 = vector.broadcast %cst_21 : f32 to vector<16x128xf32>
    %145 = arith.maximumf %143, %144 : vector<16x128xf32>
    %146 = arith.truncf %145 : vector<16x128xf32> to vector<16x128xbf16>
    %147 = vector.extract_strided_slice %146 {offsets = [0, 0], sizes = [16, 2], strides = [1, 1]} : vector<16x128xbf16> to vector<16x2xbf16>
    %148 = vector.extract_strided_slice %146 {offsets = [0, 2], sizes = [16, 2], strides = [1, 1]} : vector<16x128xbf16> to vector<16x2xbf16>
    %149 = vector.extract_strided_slice %146 {offsets = [0, 4], sizes = [16, 2], strides = [1, 1]} : vector<16x128xbf16> to vector<16x2xbf16>
    %150 = vector.extract_strided_slice %146 {offsets = [0, 6], sizes = [16, 2], strides = [1, 1]} : vector<16x128xbf16> to vector<16x2xbf16>
    %151 = vector.extract_strided_slice %146 {offsets = [0, 8], sizes = [16, 2], strides = [1, 1]} : vector<16x128xbf16> to vector<16x2xbf16>
    %152 = vector.extract_strided_slice %146 {offsets = [0, 16], sizes = [16, 2], strides = [1, 1]} : vector<16x128xbf16> to vector<16x2xbf16>
    %153 = vector.extract_strided_slice %146 {offsets = [0, 18], sizes = [16, 2], strides = [1, 1]} : vector<16x128xbf16> to vector<16x2xbf16>
    %154 = vector.extract_strided_slice %146 {offsets = [0, 20], sizes = [16, 2], strides = [1, 1]} : vector<16x128xbf16> to vector<16x2xbf16>
    %155 = vector.extract_strided_slice %146 {offsets = [0, 22], sizes = [16, 2], strides = [1, 1]} : vector<16x128xbf16> to vector<16x2xbf16>
    %156 = vector.extract_strided_slice %146 {offsets = [0, 24], sizes = [16, 2], strides = [1, 1]} : vector<16x128xbf16> to vector<16x2xbf16>
    %157 = vector.extract_strided_slice %146 {offsets = [0, 32], sizes = [16, 2], strides = [1, 1]} : vector<16x128xbf16> to vector<16x2xbf16>
    %158 = vector.extract_strided_slice %146 {offsets = [0, 34], sizes = [16, 2], strides = [1, 1]} : vector<16x128xbf16> to vector<16x2xbf16>
    %159 = vector.extract_strided_slice %146 {offsets = [0, 36], sizes = [16, 2], strides = [1, 1]} : vector<16x128xbf16> to vector<16x2xbf16>
    %160 = vector.extract_strided_slice %146 {offsets = [0, 38], sizes = [16, 2], strides = [1, 1]} : vector<16x128xbf16> to vector<16x2xbf16>
    %161 = vector.extract_strided_slice %146 {offsets = [0, 40], sizes = [16, 2], strides = [1, 1]} : vector<16x128xbf16> to vector<16x2xbf16>
    %162 = vector.extract_strided_slice %146 {offsets = [0, 48], sizes = [16, 2], strides = [1, 1]} : vector<16x128xbf16> to vector<16x2xbf16>
    %163 = vector.extract_strided_slice %146 {offsets = [0, 50], sizes = [16, 2], strides = [1, 1]} : vector<16x128xbf16> to vector<16x2xbf16>
    %164 = vector.extract_strided_slice %146 {offsets = [0, 52], sizes = [16, 2], strides = [1, 1]} : vector<16x128xbf16> to vector<16x2xbf16>
    %165 = vector.extract_strided_slice %146 {offsets = [0, 54], sizes = [16, 2], strides = [1, 1]} : vector<16x128xbf16> to vector<16x2xbf16>
    %166 = vector.extract_strided_slice %146 {offsets = [0, 56], sizes = [16, 2], strides = [1, 1]} : vector<16x128xbf16> to vector<16x2xbf16>
    %167 = vector.extract_strided_slice %146 {offsets = [0, 64], sizes = [16, 2], strides = [1, 1]} : vector<16x128xbf16> to vector<16x2xbf16>
    %168 = vector.extract_strided_slice %146 {offsets = [0, 66], sizes = [16, 2], strides = [1, 1]} : vector<16x128xbf16> to vector<16x2xbf16>
    %169 = vector.extract_strided_slice %146 {offsets = [0, 68], sizes = [16, 2], strides = [1, 1]} : vector<16x128xbf16> to vector<16x2xbf16>
    %170 = vector.extract_strided_slice %146 {offsets = [0, 70], sizes = [16, 2], strides = [1, 1]} : vector<16x128xbf16> to vector<16x2xbf16>
    %171 = vector.extract_strided_slice %146 {offsets = [0, 72], sizes = [16, 2], strides = [1, 1]} : vector<16x128xbf16> to vector<16x2xbf16>
    %172 = tpu.concatenate %147, %148, %149, %150, %151, %152, %153, %154, %155, %156, %157, %158, %159, %160, %161, %162 in 0 : vector<16x2xbf16>, vector<16x2xbf16>, vector<16x2xbf16>, vector<16x2xbf16>, vector<16x2xbf16>, vector<16x2xbf16>, vector<16x2xbf16>, vector<16x2xbf16>, vector<16x2xbf16>, vector<16x2xbf16>, vector<16x2xbf16>, vector<16x2xbf16>, vector<16x2xbf16>, vector<16x2xbf16>, vector<16x2xbf16>, vector<16x2xbf16> -> vector<256x2xbf16>
    %173 = tpu.concatenate %163, %164, %165, %166, %167, %168, %169, %170, %171 in 0 : vector<16x2xbf16>, vector<16x2xbf16>, vector<16x2xbf16>, vector<16x2xbf16>, vector<16x2xbf16>, vector<16x2xbf16>, vector<16x2xbf16>, vector<16x2xbf16>, vector<16x2xbf16> -> vector<144x2xbf16>
    %174 = tpu.concatenate %172, %173 in 0 : vector<256x2xbf16>, vector<144x2xbf16> -> vector<400x2xbf16>
    %c0_22 = arith.constant 0 : index
    %c0_23 = arith.constant 0 : index
    %175 = vector.load %arg5[%c0_22, %c0_23] : memref<128x400xbf16, #tpu.memory_space<vmem>>, vector<128x400xbf16>
    %cst_24 = arith.constant dense<0.000000e+00> : vector<128x2xf32>
    %176 = tpu.matmul %175, %174, %cst_24 {dimension_numbers = #tpu.dot_dimension_numbers<[1], [0], [0], [1], [0, 0, 1, 1], [], []>} : vector<128x400xbf16>, vector<400x2xbf16>, vector<128x2xf32> -> vector<128x2xf32>
    %c0_25 = arith.constant 0 : index
    %c0_26 = arith.constant 0 : index
    %177 = vector.load %arg6[%c0_25, %c0_26] : memref<128x1xf32, #tpu.memory_space<vmem>>, vector<128x1xf32>
    %178 = vector.broadcast %177 : vector<128x1xf32> to vector<128x2xf32>
    %179 = arith.addf %176, %178 : vector<128x2xf32>
    %cst_27 = arith.constant 0.000000e+00 : f32
    %180 = vector.broadcast %cst_27 : f32 to vector<128x2xf32>
    %181 = arith.maximumf %179, %180 : vector<128x2xf32>
    %c0_28 = arith.constant 0 : index
    %c0_29 = arith.constant 0 : index
    %182 = vector.load %arg7[%c0_28, %c0_29] : memref<128x128xbf16, #tpu.memory_space<vmem>>, vector<128x128xbf16>
    %183 = arith.truncf %181 : vector<128x2xf32> to vector<128x2xbf16>
    %cst_30 = arith.constant dense<0.000000e+00> : vector<128x2xf32>
    %184 = tpu.matmul %182, %183, %cst_30 {dimension_numbers = #tpu.dot_dimension_numbers<[1], [0], [0], [1], [0, 0, 1, 1], [], []>} : vector<128x128xbf16>, vector<128x2xbf16>, vector<128x2xf32> -> vector<128x2xf32>
    %c0_31 = arith.constant 0 : index
    %c0_32 = arith.constant 0 : index
    %185 = vector.load %arg8[%c0_31, %c0_32] : memref<128x1xf32, #tpu.memory_space<vmem>>, vector<128x1xf32>
    %186 = vector.broadcast %185 : vector<128x1xf32> to vector<128x2xf32>
    %187 = arith.addf %184, %186 : vector<128x2xf32>
    %cst_33 = arith.constant 0.000000e+00 : f32
    %188 = vector.broadcast %cst_33 : f32 to vector<128x2xf32>
    %189 = arith.maximumf %187, %188 : vector<128x2xf32>
    %c0_34 = arith.constant 0 : index
    %c0_35 = arith.constant 0 : index
    %190 = vector.load %arg9[%c0_34, %c0_35] : memref<10x128xbf16, #tpu.memory_space<vmem>>, vector<10x128xbf16>
    %191 = arith.truncf %189 : vector<128x2xf32> to vector<128x2xbf16>
    %cst_36 = arith.constant dense<0.000000e+00> : vector<10x2xf32>
    %192 = tpu.matmul %190, %191, %cst_36 {dimension_numbers = #tpu.dot_dimension_numbers<[1], [0], [0], [1], [0, 0, 1, 1], [], []>} : vector<10x128xbf16>, vector<128x2xbf16>, vector<10x2xf32> -> vector<10x2xf32>
    %c0_37 = arith.constant 0 : index
    %c0_38 = arith.constant 0 : index
    %193 = vector.load %arg10[%c0_37, %c0_38] : memref<10x1xf32, #tpu.memory_space<vmem>>, vector<10x1xf32>
    %194 = vector.broadcast %193 : vector<10x1xf32> to vector<10x2xf32>
    %195 = arith.addf %192, %194 : vector<10x2xf32>
    %cst_39 = arith.constant dense<0xFF800000> : vector<2xf32>
    %196 = vector.multi_reduction <maximumf>, %195, %cst_39 [0] : vector<10x2xf32> to vector<2xf32>
    %197 = vector.shape_cast %196 : vector<2xf32> to vector<1x2xf32>
    %198 = vector.broadcast %197 : vector<1x2xf32> to vector<10x2xf32>
    %199 = arith.subf %195, %198 : vector<10x2xf32>
    %200 = math.exp %199 : vector<10x2xf32>
    %cst_40 = arith.constant dense<0.000000e+00> : vector<2xf32>
    %201 = vector.multi_reduction <add>, %200, %cst_40 [0] : vector<10x2xf32> to vector<2xf32>
    %202 = vector.shape_cast %201 : vector<2xf32> to vector<1x2xf32>
    %203 = tpu.reciprocal %202 {approx = true} : vector<1x2xf32> -> vector<1x2xf32>
    %204 = vector.broadcast %203 : vector<1x2xf32> to vector<10x2xf32>
    %205 = arith.mulf %200, %204 : vector<10x2xf32>
    %c0_41 = arith.constant 0 : index
    %c0_42 = arith.constant 0 : index
    %206 = vector.load %arg11[%c0_41, %c0_42] : memref<10x2xf32, #tpu.memory_space<vmem>>, vector<10x2xf32>
    tpu.vector_store %arg11[%c0_41, %c0_42], %205 {strides = array<i32>} : memref<10x2xf32, #tpu.memory_space<vmem>>, vector<10x2xf32>,
    return
  }
}

</mosaic_0001>

<llo_original>
// kernel: net_forward.1
$region0: #{net_forward.1}
  #allocation0 [shape = 'u32[]', space=smem, size = 0x4, offset = 0x4, fixed_abs, tag = 'smem constant byte address 0x4 - core index']
  #allocation1 [shape = 'u32[144,128]{1,0:T(1,128)}', space=vmem, size = 0x12000, scoped, tag = 'internal scratch']
  %s0 = inlined_call_operand.vmem [shape: bf16[25,2048], index: 0, kind: input, shape index: {}]
  %s1 = inlined_call_operand.vmem [shape: bf16[8,25], index: 1, kind: input, shape index: {}]
  %s2 = inlined_call_operand.vmem [shape: f32[8,1], index: 2, kind: input, shape index: {}]
  %s3 = inlined_call_operand.vmem [shape: bf16[16,200], index: 3, kind: input, shape index: {}]
  %s4 = inlined_call_operand.vmem [shape: f32[16,1], index: 4, kind: input, shape index: {}]
  %s5 = inlined_call_operand.vmem [shape: bf16[128,400], index: 5, kind: input, shape index: {}]
  %s6 = inlined_call_operand.vmem [shape: f32[128,1], index: 6, kind: input, shape index: {}]
  %s7 = inlined_call_operand.vmem [shape: bf16[128,128], index: 7, kind: input, shape index: {}]
  %s8 = inlined_call_operand.vmem [shape: f32[128,1], index: 8, kind: input, shape index: {}]
  %s9 = inlined_call_operand.vmem [shape: bf16[10,128], index: 9, kind: input, shape index: {}]
  %s10 = inlined_call_operand.vmem [shape: f32[10,1], index: 10, kind: input, shape index: {}]
  %s11 = inlined_call_operand.vmem [shape: f32[10,2], index: 11, kind: output, shape index: {}]
  %s12 = sld [smem:[#allocation0]]
  $region54: #{net_forward.1} parent=0
    _
  %s14 = ssub.s32 1, %s12
  %s15 = scalar_select 0, %s14, %s12
  // Predicated region
  $region2: #{net_forward.1} parent=0 // pred_check
    _
  $region3: #{net_forward.1} parent=0 // pred_check_branch
    %17 = sbr.rel (0) target = $region5
  $region4: #{net_forward.1} parent=0 // pred_region
    _
  $region5: #{net_forward.1} parent=0 // pred_fallthru
    _
  // Predicated region
  $region6: #{net_forward.1} parent=0 // pred_check
    _
  $region7: #{net_forward.1} parent=0 // pred_check_branch
    %19 = sbr.rel (0) target = $region9
  $region8: #{net_forward.1} parent=0 // pred_region
    _
  $region9: #{net_forward.1} parent=0 // pred_fallthru
    _
  // Predicated region
  $region10: #{net_forward.1} parent=0 // pred_check
    _
  $region11: #{net_forward.1} parent=0 // pred_check_branch
    %21 = sbr.rel (0) target = $region13
  $region12: #{net_forward.1} parent=0 // pred_region
    _
  $region13: #{net_forward.1} parent=0 // pred_fallthru
    _
  // Predicated region
  $region14: #{net_forward.1} parent=0 // pred_check
    _
  $region15: #{net_forward.1} parent=0 // pred_check_branch
    %23 = sbr.rel (0) target = $region17
  $region16: #{net_forward.1} parent=0 // pred_region
    _
  $region17: #{net_forward.1} parent=0 // pred_fallthru
    _
  // Predicated region
  $region18: #{net_forward.1} parent=0 // pred_check
    _
  $region19: #{net_forward.1} parent=0 // pred_check_branch
    %25 = sbr.rel (0) target = $region21
  $region20: #{net_forward.1} parent=0 // pred_region
    _
  $region21: #{net_forward.1} parent=0 // pred_fallthru
    _
  // Predicated region
  $region22: #{net_forward.1} parent=0 // pred_check
    _
  $region23: #{net_forward.1} parent=0 // pred_check_branch
    %27 = sbr.rel (0) target = $region25
  $region24: #{net_forward.1} parent=0 // pred_region
    _
  $region25: #{net_forward.1} parent=0 // pred_fallthru
    _
  // Predicated region
  $region26: #{net_forward.1} parent=0 // pred_check
    _
  $region27: #{net_forward.1} parent=0 // pred_check_branch
    %29 = sbr.rel (0) target = $region29
  $region28: #{net_forward.1} parent=0 // pred_region
    _
  $region29: #{net_forward.1} parent=0 // pred_fallthru
    _
  // Predicated region
  $region30: #{net_forward.1} parent=0 // pred_check
    _
  $region31: #{net_forward.1} parent=0 // pred_check_branch
    %31 = sbr.rel (0) target = $region33
  $region32: #{net_forward.1} parent=0 // pred_region
    _
  $region33: #{net_forward.1} parent=0 // pred_fallthru
    _
  // Predicated region
  $region34: #{net_forward.1} parent=0 // pred_check
    _
  $region35: #{net_forward.1} parent=0 // pred_check_branch
    %33 = sbr.rel (0) target = $region37
  $region36: #{net_forward.1} parent=0 // pred_region
    _
  $region37: #{net_forward.1} parent=0 // pred_fallthru
    _
  // Predicated region
  $region38: #{net_forward.1} parent=0 // pred_check
    _
  $region39: #{net_forward.1} parent=0 // pred_check_branch
    %35 = sbr.rel (0) target = $region41
  $region40: #{net_forward.1} parent=0 // pred_region
    _
  $region41: #{net_forward.1} parent=0 // pred_fallthru
    _
  // Predicated region
  $region42: #{net_forward.1} parent=0 // pred_check
    _
  $region43: #{net_forward.1} parent=0 // pred_check_branch
    %37 = sbr.rel (0) target = $region45
  $region44: #{net_forward.1} parent=0 // pred_region
    _
  $region45: #{net_forward.1} parent=0 // pred_fallthru
    _
  %v39 = vld [vmem:[%s1] sm:$0xf]
  %v40 = vld [vmem:[%s0] sm:$0xff]
  %v41 = vld [vmem:[%s0 + $0x8] sm:$0xff]
  %v42 = vld [vmem:[%s0 + $0x10] sm:$0xff]
  %v43 = vld [vmem:[%s0 + $0x18] sm:$0xff]
  %v44 = vld [vmem:[%s0 + $0x20] sm:$0xff]
  %v45 = vld [vmem:[%s0 + $0x28] sm:$0xff]
  %v46 = vld [vmem:[%s0 + $0x30] sm:$0xff]
  %v47 = vld [vmem:[%s0 + $0x38] sm:$0xff]
  %v48 = vld [vmem:[%s0 + $0x40] sm:$0xff]
  %v49 = vld [vmem:[%s0 + $0x48] sm:$0xff]
  %v50 = vld [vmem:[%s0 + $0x50] sm:$0xff]
  %v51 = vld [vmem:[%s0 + $0x58] sm:$0xff]
  %v52 = vld [vmem:[%s0 + $0x60] sm:$0xff]
  %v53 = vld [vmem:[%s0 + $0x68] sm:$0xff]
  %v54 = vld [vmem:[%s0 + $0x70] sm:$0xff]
  %v55 = vld [vmem:[%s0 + $0x78] sm:$0xff]
  %v56 = vld [vmem:[%s0 + $0x80] sm:$0xff]
  %v57 = vld [vmem:[%s0 + $0x88] sm:$0xff]
  %v58 = vld [vmem:[%s0 + $0x90] sm:$0xff]
  %v59 = vld [vmem:[%s0 + $0x98] sm:$0xff]
  %v60 = vld [vmem:[%s0 + $0xa0] sm:$0xff]
  %v61 = vld [vmem:[%s0 + $0xa8] sm:$0xff]
  %v62 = vld [vmem:[%s0 + $0xb0] sm:$0xff]
  %v63 = vld [vmem:[%s0 + $0xb8] sm:$0xff]
  %v64 = vld [vmem:[%s0 + $0xc0] sm:$0x11]
  %v65 = vld [vmem:[%s0 + $0xc8] sm:$0x11]
  %v66 = vld [vmem:[%s0 + $0xd0] sm:$0x11]
  %v67 = vld [vmem:[%s0 + $0xd8] sm:$0x11]
  %v68 = vld [vmem:[%s0 + $0xe0] sm:$0x11]
  %v69 = vld [vmem:[%s0 + $0xe8] sm:$0x11]
  %v70 = vld [vmem:[%s0 + $0xf0] sm:$0x11]
  %v71 = vld [vmem:[%s0 + $0xf8] sm:$0x11]
  %v104 = vunpack.c.l.b16 %v40
  %v105 = vunpack.c.h.b16 %v40
  %v106 = vunpack.c.l.b16 %v41
  %v107 = vunpack.c.h.b16 %v41
  %v108 = vunpack.c.l.b16 %v42
  %v109 = vunpack.c.h.b16 %v42
  %v110 = vunpack.c.l.b16 %v43
  %v111 = vunpack.c.h.b16 %v43
  %v112 = vunpack.c.l.b16 %v44
  %v113 = vunpack.c.h.b16 %v44
  %v114 = vunpack.c.l.b16 %v45
  %v115 = vunpack.c.h.b16 %v45
  %v116 = vunpack.c.l.b16 %v46
  %v117 = vunpack.c.h.b16 %v46
  %v118 = vunpack.c.l.b16 %v47
  %v119 = vunpack.c.h.b16 %v47
  %v120 = vunpack.c.l.b16 %v48
  %v121 = vunpack.c.h.b16 %v48
  %v122 = vunpack.c.l.b16 %v49
  %v123 = vunpack.c.h.b16 %v49
  %v124 = vunpack.c.l.b16 %v50
  %v125 = vunpack.c.h.b16 %v50
  %v126 = vunpack.c.l.b16 %v51
  %v127 = vunpack.c.h.b16 %v51
  %v128 = vunpack.c.l.b16 %v52
  %v129 = vunpack.c.h.b16 %v52
  %v130 = vunpack.c.l.b16 %v53
  %v131 = vunpack.c.h.b16 %v53
  %v132 = vunpack.c.l.b16 %v54
  %v133 = vunpack.c.h.b16 %v54
  %v134 = vunpack.c.l.b16 %v55
  %v135 = vunpack.c.h.b16 %v55
  %v136 = vunpack.c.l.b16 %v56
  %v137 = vunpack.c.h.b16 %v56
  %v138 = vunpack.c.l.b16 %v57
  %v139 = vunpack.c.h.b16 %v57
  %v140 = vunpack.c.l.b16 %v58
  %v141 = vunpack.c.h.b16 %v58
  %v142 = vunpack.c.l.b16 %v59
  %v143 = vunpack.c.h.b16 %v59
  %v144 = vunpack.c.l.b16 %v60
  %v145 = vunpack.c.h.b16 %v60
  %v146 = vunpack.c.l.b16 %v61
  %v147 = vunpack.c.h.b16 %v61
  %v148 = vunpack.c.l.b16 %v62
  %v149 = vunpack.c.h.b16 %v62
  %v150 = vunpack.c.l.b16 %v63
  %v151 = vunpack.c.h.b16 %v63
  %v152 = vunpack.c.l.b16 %v64
  %v153 = vunpack.c.h.b16 %v64
  %v154 = vunpack.c.l.b16 %v65
  %v155 = vunpack.c.h.b16 %v65
  %v156 = vunpack.c.l.b16 %v66
  %v157 = vunpack.c.h.b16 %v66
  %v158 = vunpack.c.l.b16 %v67
  %v159 = vunpack.c.h.b16 %v67
  %v160 = vunpack.c.l.b16 %v68
  %v161 = vunpack.c.h.b16 %v68
  %v162 = vunpack.c.l.b16 %v69
  %v163 = vunpack.c.h.b16 %v69
  %v164 = vunpack.c.l.b16 %v70
  %v165 = vunpack.c.h.b16 %v70
  %v166 = vunpack.c.l.b16 %v71
  %v167 = vunpack.c.h.b16 %v71
  %v168 = vpack.c.b16 %v120, %v104
  %v169 = vpack.c.b16 %v121, %v105
  %v170 = vpack.c.b16 %v122, %v106
  %v171 = vpack.c.b16 %v123, %v107
  %v172 = vpack.c.b16 %v124, %v108
  %v173 = vpack.c.b16 %v125, %v109
  %v174 = vpack.c.b16 %v126, %v110
  %v175 = vpack.c.b16 %v127, %v111
  %v176 = vpack.c.b16 %v128, %v112
  %v177 = vpack.c.b16 %v129, %v113
  %v178 = vpack.c.b16 %v130, %v114
  %v179 = vpack.c.b16 %v131, %v115
  %v180 = vpack.c.b16 %v132, %v116
  %v181 = vpack.c.b16 %v133, %v117
  %v182 = vpack.c.b16 %v134, %v118
  %v183 = vpack.c.b16 %v135, %v119
  %v184 = vpack.c.b16 %v152, %v136
  %v185 = vpack.c.b16 %v153, %v137
  %v186 = vpack.c.b16 %v154, %v138
  %v187 = vpack.c.b16 %v155, %v139
  %v188 = vpack.c.b16 %v156, %v140
  %v189 = vpack.c.b16 %v157, %v141
  %v190 = vpack.c.b16 %v158, %v142
  %v191 = vpack.c.b16 %v159, %v143
  %v192 = vpack.c.b16 %v160, %v144
  %v193 = vpack.c.b16 %v161, %v145
  %v194 = vpack.c.b16 %v162, %v146
  %v195 = vpack.c.b16 %v163, %v147
  %v196 = vpack.c.b16 %v164, %v148
  %v197 = vpack.c.b16 %v165, %v149
  %v198 = vpack.c.b16 %v166, %v150
  %v199 = vpack.c.b16 %v167, %v151
  %vm216 = vcmask 203776
  %v218 = vsel %vm216, %v39, 0
  %vm220 = vcmask 1043456
  %vm221 = vcmask 1044480
  %v222 = vsel %vm220, 4294967295, 65535
  %v223 = vsel %vm221, %v222, 0
  %v225 = vand.u32 %v184, %v223
  %v228 = vand.u32 %v185, %v223
  %v231 = vand.u32 %v186, %v223
  %v234 = vand.u32 %v187, %v223
  %v237 = vand.u32 %v188, %v223
  %v240 = vand.u32 %v189, %v223
  %v243 = vand.u32 %v190, %v223
  %v246 = vand.u32 %v191, %v223
  %v249 = vand.u32 %v192, %v223
  %v252 = vand.u32 %v193, %v223
  %v255 = vand.u32 %v194, %v223
  %v258 = vand.u32 %v195, %v223
  %v261 = vand.u32 %v196, %v223
  %v264 = vand.u32 %v197, %v223
  %v267 = vand.u32 %v198, %v223
  %v270 = vand.u32 %v199, %v223
  %272 = vmatprep.subr.bf16.mxu0 0
  %273 = vmatpush1.bf16.msra.mxu0 0
  %274 = vmatprep.subr.bf16.mxu0 0
  %275 = vmatpush1.bf16.msra.mxu0 0
  %276 = vmatprep.subr.bf16.mxu0 0
  %277 = vmatpush1.bf16.msra.mxu0 0
  %278 = vmatprep.subr.bf16.mxu0 0
  %279 = vmatpush1.bf16.msra.mxu0 0
  %280 = vmatprep.subr.bf16.mxu0 0
  %281 = vmatpush1.bf16.msra.mxu0 0
  %282 = vmatprep.subr.bf16.mxu0 0
  %283 = vmatpush1.bf16.msra.mxu0 0
  %284 = vmatprep.subr.bf16.mxu0 %v228
  %285 = vmatpush1.bf16.msra.mxu0 %v225
  %286 = vmatprep.subr.bf16.mxu0 %v169
  %287 = vmatpush1.bf16.msra.mxu0 %v168
  %288 = vmatprep.subr.bf16.mxu0 0
  %289 = vmatpush2.bf16.msra.mxu0 0
  %290 = vmatprep.subr.bf16.mxu0 0
  %291 = vmatpush2.bf16.msra.mxu0 0
  %292 = vmatprep.subr.bf16.mxu0 0
  %293 = vmatpush2.bf16.msra.mxu0 0
  %294 = vmatprep.subr.bf16.mxu0 0
  %295 = vmatpush2.bf16.msra.mxu0 0
  %296 = vmatprep.subr.bf16.mxu0 0
  %297 = vmatpush2.bf16.msra.mxu0 0
  %298 = vmatprep.subr.bf16.mxu0 0
  %299 = vmatpush2.bf16.msra.mxu0 0
  %300 = vmatprep.subr.bf16.mxu0 0
  %301 = vmatpush2.bf16.msra.mxu0 0
  %302 = vmatprep.subr.bf16.mxu0 0
  %303 = vmatpush2.bf16.msra.mxu0 0
  %304 = vmatprep.mubr.bf16.mxu0 0
  %305 = vmatmul.mubr.bf16.gmra.mxu0 %v218
  %v306 = vpop.f32.mrf.mxu0
  %v307 = vadd.f32 0.0, %v306
  %v308 = vpop.f32.mrf.mxu0
  %v309 = vadd.f32 0.0, %v308
  %v310 = vpop.f32.mrf.mxu0
  %v311 = vpop.f32.mrf.mxu0
  %312 = vdwg.mxu0
  %313 = vmatprep.subr.bf16.mxu0 0
  %314 = vmatpush1.bf16.msra.mxu0 0
  %315 = vmatprep.subr.bf16.mxu0 0
  %316 = vmatpush1.bf16.msra.mxu0 0
  %317 = vmatprep.subr.bf16.mxu0 0
  %318 = vmatpush1.bf16.msra.mxu0 0
  %319 = vmatprep.subr.bf16.mxu0 0
  %320 = vmatpush1.bf16.msra.mxu0 0
  %321 = vmatprep.subr.bf16.mxu0 0
  %322 = vmatpush1.bf16.msra.mxu0 0
  %323 = vmatprep.subr.bf16.mxu0 0
  %324 = vmatpush1.bf16.msra.mxu0 0
  %325 = vmatprep.subr.bf16.mxu0 %v234
  %326 = vmatpush1.bf16.msra.mxu0 %v231
  %327 = vmatprep.subr.bf16.mxu0 %v171
  %328 = vmatpush1.bf16.msra.mxu0 %v170
  %329 = vmatprep.subr.bf16.mxu0 0
  %330 = vmatpush2.bf16.msra.mxu0 0
  %331 = vmatprep.subr.bf16.mxu0 0
  %332 = vmatpush2.bf16.msra.mxu0 0
  %333 = vmatprep.subr.bf16.mxu0 0
  %334 = vmatpush2.bf16.msra.mxu0 0
  %335 = vmatprep.subr.bf16.mxu0 0
  %336 = vmatpush2.bf16.msra.mxu0 0
  %337 = vmatprep.subr.bf16.mxu0 0
  %338 = vmatpush2.bf16.msra.mxu0 0
  %339 = vmatprep.subr.bf16.mxu0 0
  %340 = vmatpush2.bf16.msra.mxu0 0
  %341 = vmatprep.subr.bf16.mxu0 0
  %342 = vmatpush2.bf16.msra.mxu0 0
  %343 = vmatprep.subr.bf16.mxu0 0
  %344 = vmatpush2.bf16.msra.mxu0 0
  %345 = vmatprep.mubr.bf16.mxu0 0
  %346 = vmatmul.mubr.bf16.gmra.mxu0 %v218
  %v347 = vpop.f32.mrf.mxu0
  %v348 = vadd.f32 0.0, %v347
  %v349 = vpop.f32.mrf.mxu0
  %v350 = vadd.f32 0.0, %v349
  %v351 = vpop.f32.mrf.mxu0
  %v352 = vpop.f32.mrf.mxu0
  %353 = vdwg.mxu0
  %354 = vmatprep.subr.bf16.mxu0 0
  %355 = vmatpush1.bf16.msra.mxu0 0
  %356 = vmatprep.subr.bf16.mxu0 0
  %357 = vmatpush1.bf16.msra.mxu0 0
  %358 = vmatprep.subr.bf16.mxu0 0
  %359 = vmatpush1.bf16.msra.mxu0 0
  %360 = vmatprep.subr.bf16.mxu0 0
  %361 = vmatpush1.bf16.msra.mxu0 0
  %362 = vmatprep.subr.bf16.mxu0 0
  %363 = vmatpush1.bf16.msra.mxu0 0
  %364 = vmatprep.subr.bf16.mxu0 0
  %365 = vmatpush1.bf16.msra.mxu0 0
  %366 = vmatprep.subr.bf16.mxu0 %v240
  %367 = vmatpush1.bf16.msra.mxu0 %v237
  %368 = vmatprep.subr.bf16.mxu0 %v173
  %369 = vmatpush1.bf16.msra.mxu0 %v172
  %370 = vmatprep.subr.bf16.mxu0 0
  %371 = vmatpush2.bf16.msra.mxu0 0
  %372 = vmatprep.subr.bf16.mxu0 0
  %373 = vmatpush2.bf16.msra.mxu0 0
  %374 = vmatprep.subr.bf16.mxu0 0
  %375 = vmatpush2.bf16.msra.mxu0 0
  %376 = vmatprep.subr.bf16.mxu0 0
  %377 = vmatpush2.bf16.msra.mxu0 0
  %378 = vmatprep.subr.bf16.mxu0 0
  %379 = vmatpush2.bf16.msra.mxu0 0
  %380 = vmatprep.subr.bf16.mxu0 0
  %381 = vmatpush2.bf16.msra.mxu0 0
  %382 = vmatprep.subr.bf16.mxu0 0
  %383 = vmatpush2.bf16.msra.mxu0 0
  %384 = vmatprep.subr.bf16.mxu0 0
  %385 = vmatpush2.bf16.msra.mxu0 0
  %386 = vmatprep.mubr.bf16.mxu0 0
  %387 = vmatmul.mubr.bf16.gmra.mxu0 %v218
  %v388 = vpop.f32.mrf.mxu0
  %v389 = vadd.f32 0.0, %v388
  %v390 = vpop.f32.mrf.mxu0
  %v391 = vadd.f32 0.0, %v390
  %v392 = vpop.f32.mrf.mxu0
  %v393 = vpop.f32.mrf.mxu0
  %394 = vdwg.mxu0
  %395 = vmatprep.subr.bf16.mxu0 0
  %396 = vmatpush1.bf16.msra.mxu0 0
  %397 = vmatprep.subr.bf16.mxu0 0
  %398 = vmatpush1.bf16.msra.mxu0 0
  %399 = vmatprep.subr.bf16.mxu0 0
  %400 = vmatpush1.bf16.msra.mxu0 0
  %401 = vmatprep.subr.bf16.mxu0 0
  %402 = vmatpush1.bf16.msra.mxu0 0
  %403 = vmatprep.subr.bf16.mxu0 0
  %404 = vmatpush1.bf16.msra.mxu0 0
  %405 = vmatprep.subr.bf16.mxu0 0
  %406 = vmatpush1.bf16.msra.mxu0 0
  %407 = vmatprep.subr.bf16.mxu0 %v246
  %408 = vmatpush1.bf16.msra.mxu0 %v243
  %409 = vmatprep.subr.bf16.mxu0 %v175
  %410 = vmatpush1.bf16.msra.mxu0 %v174
  %411 = vmatprep.subr.bf16.mxu0 0
  %412 = vmatpush2.bf16.msra.mxu0 0
  %413 = vmatprep.subr.bf16.mxu0 0
  %414 = vmatpush2.bf16.msra.mxu0 0
  %415 = vmatprep.subr.bf16.mxu0 0
  %416 = vmatpush2.bf16.msra.mxu0 0
  %417 = vmatprep.subr.bf16.mxu0 0
  %418 = vmatpush2.bf16.msra.mxu0 0
  %419 = vmatprep.subr.bf16.mxu0 0
  %420 = vmatpush2.bf16.msra.mxu0 0
  %421 = vmatprep.subr.bf16.mxu0 0
  %422 = vmatpush2.bf16.msra.mxu0 0
  %423 = vmatprep.subr.bf16.mxu0 0
  %424 = vmatpush2.bf16.msra.mxu0 0
  %425 = vmatprep.subr.bf16.mxu0 0
  %426 = vmatpush2.bf16.msra.mxu0 0
  %427 = vmatprep.mubr.bf16.mxu0 0
  %428 = vmatmul.mubr.bf16.gmra.mxu0 %v218
  %v429 = vpop.f32.mrf.mxu0
  %v430 = vadd.f32 0.0, %v429
  %v431 = vpop.f32.mrf.mxu0
  %v432 = vadd.f32 0.0, %v431
  %v433 = vpop.f32.mrf.mxu0
  %v434 = vpop.f32.mrf.mxu0
  %435 = vdwg.mxu0
  %436 = vmatprep.subr.bf16.mxu0 0
  %437 = vmatpush1.bf16.msra.mxu0 0
  %438 = vmatprep.subr.bf16.mxu0 0
  %439 = vmatpush1.bf16.msra.mxu0 0
  %440 = vmatprep.subr.bf16.mxu0 0
  %441 = vmatpush1.bf16.msra.mxu0 0
  %442 = vmatprep.subr.bf16.mxu0 0
  %443 = vmatpush1.bf16.msra.mxu0 0
  %444 = vmatprep.subr.bf16.mxu0 0
  %445 = vmatpush1.bf16.msra.mxu0 0
  %446 = vmatprep.subr.bf16.mxu0 0
  %447 = vmatpush1.bf16.msra.mxu0 0
  %448 = vmatprep.subr.bf16.mxu0 %v252
  %449 = vmatpush1.bf16.msra.mxu0 %v249
  %450 = vmatprep.subr.bf16.mxu0 %v177
  %451 = vmatpush1.bf16.msra.mxu0 %v176
  %452 = vmatprep.subr.bf16.mxu0 0
  %453 = vmatpush2.bf16.msra.mxu0 0
  %454 = vmatprep.subr.bf16.mxu0 0
  %455 = vmatpush2.bf16.msra.mxu0 0
  %456 = vmatprep.subr.bf16.mxu0 0
  %457 = vmatpush2.bf16.msra.mxu0 0
  %458 = vmatprep.subr.bf16.mxu0 0
  %459 = vmatpush2.bf16.msra.mxu0 0
  %460 = vmatprep.subr.bf16.mxu0 0
  %461 = vmatpush2.bf16.msra.mxu0 0
  %462 = vmatprep.subr.bf16.mxu0 0
  %463 = vmatpush2.bf16.msra.mxu0 0
  %464 = vmatprep.subr.bf16.mxu0 0
  %465 = vmatpush2.bf16.msra.mxu0 0
  %466 = vmatprep.subr.bf16.mxu0 0
  %467 = vmatpush2.bf16.msra.mxu0 0
  %468 = vmatprep.mubr.bf16.mxu0 0
  %469 = vmatmul.mubr.bf16.gmra.mxu0 %v218
  %v470 = vpop.f32.mrf.mxu0
  %v471 = vadd.f32 0.0, %v470
  %v472 = vpop.f32.mrf.mxu0
  %v473 = vadd.f32 0.0, %v472
  %v474 = vpop.f32.mrf.mxu0
  %v475 = vpop.f32.mrf.mxu0
  %476 = vdwg.mxu0
  %477 = vmatprep.subr.bf16.mxu0 0
  %478 = vmatpush1.bf16.msra.mxu0 0
  %479 = vmatprep.subr.bf16.mxu0 0
  %480 = vmatpush1.bf16.msra.mxu0 0
  %481 = vmatprep.subr.bf16.mxu0 0
  %482 = vmatpush1.bf16.msra.mxu0 0
  %483 = vmatprep.subr.bf16.mxu0 0
  %484 = vmatpush1.bf16.msra.mxu0 0
  %485 = vmatprep.subr.bf16.mxu0 0
  %486 = vmatpush1.bf16.msra.mxu0 0
  %487 = vmatprep.subr.bf16.mxu0 0
  %488 = vmatpush1.bf16.msra.mxu0 0
  %489 = vmatprep.subr.bf16.mxu0 %v258
  %490 = vmatpush1.bf16.msra.mxu0 %v255
  %491 = vmatprep.subr.bf16.mxu0 %v179
  %492 = vmatpush1.bf16.msra.mxu0 %v178
  %493 = vmatprep.subr.bf16.mxu0 0
  %494 = vmatpush2.bf16.msra.mxu0 0
  %495 = vmatprep.subr.bf16.mxu0 0
  %496 = vmatpush2.bf16.msra.mxu0 0
  %497 = vmatprep.subr.bf16.mxu0 0
  %498 = vmatpush2.bf16.msra.mxu0 0
  %499 = vmatprep.subr.bf16.mxu0 0
  %500 = vmatpush2.bf16.msra.mxu0 0
  %501 = vmatprep.subr.bf16.mxu0 0
  %502 = vmatpush2.bf16.msra.mxu0 0
  %503 = vmatprep.subr.bf16.mxu0 0
  %504 = vmatpush2.bf16.msra.mxu0 0
  %505 = vmatprep.subr.bf16.mxu0 0
  %506 = vmatpush2.bf16.msra.mxu0 0
  %507 = vmatprep.subr.bf16.mxu0 0
  %508 = vmatpush2.bf16.msra.mxu0 0
  %509 = vmatprep.mubr.bf16.mxu0 0
  %510 = vmatmul.mubr.bf16.gmra.mxu0 %v218
  %v511 = vpop.f32.mrf.mxu0
  %v512 = vadd.f32 0.0, %v511
  %v513 = vpop.f32.mrf.mxu0
  %v514 = vadd.f32 0.0, %v513
  %v515 = vpop.f32.mrf.mxu0
  %v516 = vpop.f32.mrf.mxu0
  %517 = vdwg.mxu0
  %518 = vmatprep.subr.bf16.mxu0 0
  %519 = vmatpush1.bf16.msra.mxu0 0
  %520 = vmatprep.subr.bf16.mxu0 0
  %521 = vmatpush1.bf16.msra.mxu0 0
  %522 = vmatprep.subr.bf16.mxu0 0
  %523 = vmatpush1.bf16.msra.mxu0 0
  %524 = vmatprep.subr.bf16.mxu0 0
  %525 = vmatpush1.bf16.msra.mxu0 0
  %526 = vmatprep.subr.bf16.mxu0 0
  %527 = vmatpush1.bf16.msra.mxu0 0
  %528 = vmatprep.subr.bf16.mxu0 0
  %529 = vmatpush1.bf16.msra.mxu0 0
  %530 = vmatprep.subr.bf16.mxu0 %v264
  %531 = vmatpush1.bf16.msra.mxu0 %v261
  %532 = vmatprep.subr.bf16.mxu0 %v181
  %533 = vmatpush1.bf16.msra.mxu0 %v180
  %534 = vmatprep.subr.bf16.mxu0 0
  %535 = vmatpush2.bf16.msra.mxu0 0
  %536 = vmatprep.subr.bf16.mxu0 0
  %537 = vmatpush2.bf16.msra.mxu0 0
  %538 = vmatprep.subr.bf16.mxu0 0
  %539 = vmatpush2.bf16.msra.mxu0 0
  %540 = vmatprep.subr.bf16.mxu0 0
  %541 = vmatpush2.bf16.msra.mxu0 0
  %542 = vmatprep.subr.bf16.mxu0 0
  %543 = vmatpush2.bf16.msra.mxu0 0
  %544 = vmatprep.subr.bf16.mxu0 0
  %545 = vmatpush2.bf16.msra.mxu0 0
  %546 = vmatprep.subr.bf16.mxu0 0
  %547 = vmatpush2.bf16.msra.mxu0 0
  %548 = vmatprep.subr.bf16.mxu0 0
  %549 = vmatpush2.bf16.msra.mxu0 0
  %550 = vmatprep.mubr.bf16.mxu0 0
  %551 = vmatmul.mubr.bf16.gmra.mxu0 %v218
  %v552 = vpop.f32.mrf.mxu0
  %v553 = vadd.f32 0.0, %v552
  %v554 = vpop.f32.mrf.mxu0
  %v555 = vadd.f32 0.0, %v554
  %v556 = vpop.f32.mrf.mxu0
  %v557 = vpop.f32.mrf.mxu0
  %558 = vdwg.mxu0
  %559 = vmatprep.subr.bf16.mxu0 0
  %560 = vmatpush1.bf16.msra.mxu0 0
  %561 = vmatprep.subr.bf16.mxu0 0
  %562 = vmatpush1.bf16.msra.mxu0 0
  %563 = vmatprep.subr.bf16.mxu0 0
  %564 = vmatpush1.bf16.msra.mxu0 0
  %565 = vmatprep.subr.bf16.mxu0 0
  %566 = vmatpush1.bf16.msra.mxu0 0
  %567 = vmatprep.subr.bf16.mxu0 0
  %568 = vmatpush1.bf16.msra.mxu0 0
  %569 = vmatprep.subr.bf16.mxu0 0
  %570 = vmatpush1.bf16.msra.mxu0 0
  %571 = vmatprep.subr.bf16.mxu0 %v270
  %572 = vmatpush1.bf16.msra.mxu0 %v267
  %573 = vmatprep.subr.bf16.mxu0 %v183
  %574 = vmatpush1.bf16.msra.mxu0 %v182
  %575 = vmatprep.subr.bf16.mxu0 0
  %576 = vmatpush2.bf16.msra.mxu0 0
  %577 = vmatprep.subr.bf16.mxu0 0
  %578 = vmatpush2.bf16.msra.mxu0 0
  %579 = vmatprep.subr.bf16.mxu0 0
  %580 = vmatpush2.bf16.msra.mxu0 0
  %581 = vmatprep.subr.bf16.mxu0 0
  %582 = vmatpush2.bf16.msra.mxu0 0
  %583 = vmatprep.subr.bf16.mxu0 0
  %584 = vmatpush2.bf16.msra.mxu0 0
  %585 = vmatprep.subr.bf16.mxu0 0
  %586 = vmatpush2.bf16.msra.mxu0 0
  %587 = vmatprep.subr.bf16.mxu0 0
  %588 = vmatpush2.bf16.msra.mxu0 0
  %589 = vmatprep.subr.bf16.mxu0 0
  %590 = vmatpush2.bf16.msra.mxu0 0
  %591 = vmatprep.mubr.bf16.mxu0 0
  %592 = vmatmul.mubr.bf16.gmra.mxu0 %v218
  %v593 = vpop.f32.mrf.mxu0
  %v594 = vadd.f32 0.0, %v593
  %v595 = vpop.f32.mrf.mxu0
  %v596 = vadd.f32 0.0, %v595
  %v597 = vpop.f32.mrf.mxu0
  %v598 = vpop.f32.mrf.mxu0
  %599 = vdwg.mxu0
  %v600 = vmax.f32 %v307, %v389
  %v601 = vmax.f32 %v309, %v391
  %v602 = vmax.f32 %v348, %v430
  %v603 = vmax.f32 %v350, %v432
  %v604 = vmax.f32 %v471, %v553
  %v605 = vmax.f32 %v473, %v555
  %v606 = vmax.f32 %v512, %v594
  %v607 = vmax.f32 %v514, %v596
  %v608 = vmax.f32 %v600, %v604
  %v609 = vmax.f32 %v601, %v605
  %v610 = vmax.f32 %v602, %v606
  %v611 = vmax.f32 %v603, %v607
  %v612 = vld [vmem:[%s2] sm:$0xff]
  %614 = vset.pattern.permute.xlu0 0
  %615 = vperm.xlu0 %614, %v612
  %v616 = vpop.permute.xlu0 %615
  %v618 = vadd.f32 %v608, %v616
  %v619 = vadd.f32 %v609, %v616
  %v620 = vadd.f32 %v610, %v616
  %v621 = vadd.f32 %v611, %v616
  %v622 = vmax.f32 %v618, 0.0
  %v623 = vmax.f32 %v619, 0.0
  %v624 = vmax.f32 %v620, 0.0
  %v625 = vmax.f32 %v621, 0.0
  %v626 = vpack.c.bf16 %v622, %v622
  %v627 = vpack.c.bf16 %v623, %v623
  %v628 = vpack.c.bf16 %v624, %v624
  %v629 = vpack.c.bf16 %v625, %v625
  %v631 = vrot.slane %v627, 4
  %633 = vrot.lane.b32.xlu0 %v626, 126
  %v634 = vpop.permute.xlu0 %633
  %635 = vrot.lane.b32.xlu0 %v627, 126
  %v636 = vpop.permute.xlu0 %635
  %vm637 = vcmask 1031168
  %v638 = vsel %vm637, %v634, %v636
  %v640 = vrot.slane %v628, 4
  %641 = vrot.lane.b32.xlu0 %v631, 126
  %v642 = vpop.permute.xlu0 %641
  %643 = vrot.lane.b32.xlu0 %v640, 126
  %v644 = vpop.permute.xlu0 %643
  %v645 = vsel %vm637, %v642, %v644
  %646 = vrot.lane.b32.xlu0 %v626, 124
  %v647 = vpop.permute.xlu0 %646
  %648 = vrot.lane.b32.xlu0 %v627, 124
  %v649 = vpop.permute.xlu0 %648
  %vm650 = vcmask 1014784
  %v651 = vsel %vm650, %v647, %v649
  %v653 = vrot.slane %v629, 4
  %654 = vrot.lane.b32.xlu0 %v653, 126
  %v655 = vpop.permute.xlu0 %654
  %v656 = vsel %vm637, %v644, %v655
  %658 = vrot.lane.b32.xlu0 %v629, 126
  %v659 = vpop.permute.xlu0 %658
  %660 = vrot.lane.b32.xlu0 0, 126
  %v661 = vpop.permute.xlu0 %660
  %v662 = vsel %vm637, %v659, %v661
  %663 = vrot.lane.b32.xlu0 %v640, 124
  %v664 = vpop.permute.xlu0 %663
  %665 = vrot.lane.b32.xlu0 %v653, 124
  %v666 = vpop.permute.xlu0 %665
  %v667 = vsel %vm650, %v664, %v666
  %668 = vrot.lane.b32.xlu0 %v626, 112
  %v669 = vpop.permute.xlu0 %668
  %670 = vrot.lane.b32.xlu0 %v627, 112
  %v671 = vpop.permute.xlu0 %670
  %vm672 = vcmask 916480
  %v673 = vsel %vm672, %v669, %v671
  %674 = vrot.lane.b32.xlu0 %v631, 112
  %v675 = vpop.permute.xlu0 %674
  %676 = vrot.lane.b32.xlu0 %v640, 112
  %v677 = vpop.permute.xlu0 %676
  %v678 = vsel %vm672, %v675, %v677
  %679 = vrot.lane.b32.xlu0 %v626, 110
  %v680 = vpop.permute.xlu0 %679
  %681 = vrot.lane.b32.xlu0 %v627, 110
  %v682 = vpop.permute.xlu0 %681
  %vm683 = vcmask 900096
  %v684 = vsel %vm683, %v680, %v682
  %685 = vrot.lane.b32.xlu0 %v631, 110
  %v686 = vpop.permute.xlu0 %685
  %687 = vrot.lane.b32.xlu0 %v640, 110
  %v688 = vpop.permute.xlu0 %687
  %v689 = vsel %vm683, %v686, %v688
  %690 = vrot.lane.b32.xlu0 %v626, 108
  %v691 = vpop.permute.xlu0 %690
  %692 = vrot.lane.b32.xlu0 %v627, 108
  %v693 = vpop.permute.xlu0 %692
  %vm694 = vcmask 883712
  %v695 = vsel %vm694, %v691, %v693
  %696 = vrot.lane.b32.xlu0 %v653, 112
  %v697 = vpop.permute.xlu0 %696
  %v698 = vsel %vm672, %v677, %v697
  %v701 = vsel %vm220, %v626, %v631
  %v705 = vsel %vm220, %v638, %v645
  %v709 = vsel %vm220, %v651, %v640
  %v713 = vsel %vm220, %v629, %v656
  %v717 = vsel %vm220, %v662, %v667
  %v721 = vsel %vm220, %v673, %v678
  %v725 = vsel %vm220, %v684, %v689
  %v729 = vsel %vm220, %v695, %v698
  %v733 = vsel %vm220, 0, %v655
  %v736 = vsel %vm220, %v661, %v666
  %v739 = vsel %vm220, %v671, %v677
  %v742 = vsel %vm220, %v682, %v688
  %751 = vrot.lane.b32.xlu0 %v713, 112
  %v752 = vpop.permute.xlu0 %751
  %753 = vrot.lane.b32.xlu0 %v733, 112
  %v754 = vpop.permute.xlu0 %753
  %755 = vrot.lane.b32.xlu0 %v717, 112
  %v756 = vpop.permute.xlu0 %755
  %757 = vrot.lane.b32.xlu0 %v736, 112
  %v758 = vpop.permute.xlu0 %757
  %759 = vrot.lane.b32.xlu0 %v721, 112
  %v760 = vpop.permute.xlu0 %759
  %761 = vrot.lane.b32.xlu0 %v739, 112
  %v762 = vpop.permute.xlu0 %761
  %763 = vrot.lane.b32.xlu0 %v725, 112
  %v764 = vpop.permute.xlu0 %763
  %765 = vrot.lane.b32.xlu0 %v742, 112
  %v766 = vpop.permute.xlu0 %765
  %767 = vrot.lane.b32.xlu0 %v695, 112
  %v768 = vpop.permute.xlu0 %767
  %769 = vrot.lane.b32.xlu0 %v693, 112
  %v770 = vpop.permute.xlu0 %769
  %v771 = vsel %vm672, %v752, %v754
  %v772 = vsel %vm672, %v756, %v758
  %v773 = vsel %vm672, %v760, %v762
  %v774 = vsel %vm672, %v764, %v766
  %v775 = vsel %vm672, %v768, %v770
  %v780 = vld [vmem:[%s3] sm:$0xff]
  %v781 = vld [vmem:[%s3 + $0x8] sm:$0xff]
  %v784 = vunpack.c.l.b16 %v780
  %v785 = vunpack.c.h.b16 %v780
  %v786 = vunpack.c.l.b16 %v781
  %v787 = vunpack.c.h.b16 %v781
  %v788 = vpack.c.b16 %v786, %v784
  %v789 = vpack.c.b16 %v787, %v785
  %vm791 = vcmask 588800
  %v793 = vsel %vm791, %v789, 0
  %v796 = vsel %vm220, %v775, 0
  %798 = vmatprep.subr.bf16.mxu0 0
  %799 = vmatpush1.bf16.msra.mxu0 %v729
  %800 = vmatprep.subr.bf16.mxu0 0
  %801 = vmatpush1.bf16.msra.mxu0 %v725
  %802 = vmatprep.subr.bf16.mxu0 0
  %803 = vmatpush1.bf16.msra.mxu0 %v721
  %804 = vmatprep.subr.bf16.mxu0 0
  %805 = vmatpush1.bf16.msra.mxu0 %v717
  %806 = vmatprep.subr.bf16.mxu0 0
  %807 = vmatpush1.bf16.msra.mxu0 %v713
  %808 = vmatprep.subr.bf16.mxu0 0
  %809 = vmatpush1.bf16.msra.mxu0 %v709
  %810 = vmatprep.subr.bf16.mxu0 0
  %811 = vmatpush1.bf16.msra.mxu0 %v705
  %812 = vmatprep.subr.bf16.mxu0 0
  %813 = vmatpush1.bf16.msra.mxu0 %v701
  %814 = vmatprep.subr.bf16.mxu0 0
  %815 = vmatpush2.bf16.msra.mxu0 0
  %816 = vmatprep.subr.bf16.mxu0 0
  %817 = vmatpush2.bf16.msra.mxu0 0
  %818 = vmatprep.subr.bf16.mxu0 0
  %819 = vmatpush2.bf16.msra.mxu0 0
  %820 = vmatprep.subr.bf16.mxu0 0
  %821 = vmatpush2.bf16.msra.mxu0 %v796
  %822 = vmatprep.subr.bf16.mxu0 0
  %823 = vmatpush2.bf16.msra.mxu0 %v774
  %824 = vmatprep.subr.bf16.mxu0 0
  %825 = vmatpush2.bf16.msra.mxu0 %v773
  %826 = vmatprep.subr.bf16.mxu0 0
  %827 = vmatpush2.bf16.msra.mxu0 %v772
  %828 = vmatprep.subr.bf16.mxu0 0
  %829 = vmatpush2.bf16.msra.mxu0 %v771
  %830 = vmatprep.mubr.bf16.mxu0 %v793
  %831 = vmatmul.mubr.bf16.gmra.mxu0 %v788
  %v832 = vpop.f32.mrf.mxu0
  %v833 = vadd.f32 0.0, %v832
  %v834 = vpop.f32.mrf.mxu0
  %v835 = vpop.f32.mrf.mxu0
  %v836 = vadd.f32 0.0, %v835
  %v837 = vpop.f32.mrf.mxu0
  %838 = vdwg.mxu0
  %v839 = vrot.slane %v626, 4
  %840 = vrot.lane.b32.xlu0 %v839, 126
  %v841 = vpop.permute.xlu0 %840
  %v842 = vsel %vm637, %v841, %v642
  %843 = vrot.lane.b32.xlu0 %v628, 126
  %v844 = vpop.permute.xlu0 %843
  %v845 = vsel %vm637, %v636, %v844
  %846 = vrot.lane.b32.xlu0 %v839, 124
  %v847 = vpop.permute.xlu0 %846
  %848 = vrot.lane.b32.xlu0 %v631, 124
  %v849 = vpop.permute.xlu0 %848
  %v850 = vsel %vm650, %v847, %v849
  %851 = vrot.lane.b32.xlu0 %v628, 124
  %v852 = vpop.permute.xlu0 %851
  %v853 = vsel %vm650, %v649, %v852
  %v854 = vsel %vm637, %v844, %v659
  %v855 = vrot.slane 0, 4
  %856 = vrot.lane.b32.xlu0 %v855, 126
  %v857 = vpop.permute.xlu0 %856
  %v858 = vsel %vm637, %v655, %v857
  %859 = vrot.lane.b32.xlu0 %v629, 124
  %v860 = vpop.permute.xlu0 %859
  %v861 = vsel %vm650, %v852, %v860
  %862 = vrot.lane.b32.xlu0 %v855, 124
  %v863 = vpop.permute.xlu0 %862
  %v864 = vsel %vm650, %v666, %v863
  %865 = vrot.lane.b32.xlu0 %v628, 112
  %v866 = vpop.permute.xlu0 %865
  %v867 = vsel %vm672, %v671, %v866
  %868 = vrot.lane.b32.xlu0 %v839, 110
  %v869 = vpop.permute.xlu0 %868
  %v870 = vsel %vm683, %v869, %v686
  %871 = vrot.lane.b32.xlu0 %v628, 110
  %v872 = vpop.permute.xlu0 %871
  %v873 = vsel %vm683, %v682, %v872
  %874 = vrot.lane.b32.xlu0 %v839, 108
  %v875 = vpop.permute.xlu0 %874
  %876 = vrot.lane.b32.xlu0 %v631, 108
  %v877 = vpop.permute.xlu0 %876
  %v878 = vsel %vm694, %v875, %v877
  %879 = vrot.lane.b32.xlu0 %v628, 108
  %v880 = vpop.permute.xlu0 %879
  %v881 = vsel %vm694, %v693, %v880
  %882 = vrot.lane.b32.xlu0 %v855, 112
  %v883 = vpop.permute.xlu0 %882
  %v884 = vsel %vm672, %v697, %v883
  %v887 = vsel %vm220, %v627, %v842
  %v891 = vsel %vm220, %v845, %v850
  %v895 = vsel %vm220, %v853, %v653
  %v899 = vsel %vm220, %v854, %v858
  %v903 = vsel %vm220, %v861, %v864
  %v907 = vsel %vm220, %v867, %v870
  %v911 = vsel %vm220, %v873, %v878
  %v915 = vsel %vm220, %v881, %v884
  %917 = vrot.lane.b32.xlu0 %v627, 114
  %v918 = vpop.permute.xlu0 %917
  %919 = vrot.lane.b32.xlu0 %v628, 114
  %v920 = vpop.permute.xlu0 %919
  %vm921 = vcmask 932864
  %v922 = vsel %vm921, %v918, %v920
  %923 = vrot.lane.b32.xlu0 %v839, 112
  %v924 = vpop.permute.xlu0 %923
  %v925 = vsel %vm672, %v924, %v675
  %v927 = vsel %vm220, %v628, %v653
  %v929 = vsel %vm220, %v629, %v855
  %v932 = vsel %vm220, %v659, %v857
  %v935 = vsel %vm220, %v922, %v925
  %v938 = vsel %vm220, %v920, %v675
  %v941 = vsel %vm220, %v866, %v686
  %950 = vrot.lane.b32.xlu0 %v927, 110
  %v951 = vpop.permute.xlu0 %950
  %952 = vrot.lane.b32.xlu0 %v929, 110
  %v953 = vpop.permute.xlu0 %952
  %954 = vrot.lane.b32.xlu0 %v899, 110
  %v955 = vpop.permute.xlu0 %954
  %956 = vrot.lane.b32.xlu0 %v932, 110
  %v957 = vpop.permute.xlu0 %956
  %958 = vrot.lane.b32.xlu0 %v935, 110
  %v959 = vpop.permute.xlu0 %958
  %960 = vrot.lane.b32.xlu0 %v938, 110
  %v961 = vpop.permute.xlu0 %960
  %962 = vrot.lane.b32.xlu0 %v907, 110
  %v963 = vpop.permute.xlu0 %962
  %964 = vrot.lane.b32.xlu0 %v941, 110
  %v965 = vpop.permute.xlu0 %964
  %966 = vrot.lane.b32.xlu0 %v873, 110
  %v967 = vpop.permute.xlu0 %966
  %968 = vrot.lane.b32.xlu0 %v872, 110
  %v969 = vpop.permute.xlu0 %968
  %v970 = vsel %vm683, %v951, %v953
  %v971 = vsel %vm683, %v955, %v957
  %v972 = vsel %vm683, %v959, %v961
  %v973 = vsel %vm683, %v963, %v965
  %v974 = vsel %vm683, %v967, %v969
  %v980 = vsel %vm220, %v974, 0
  %982 = vmatprep.subr.bf16.mxu0 0
  %983 = vmatpush1.bf16.msra.mxu0 %v915
  %984 = vmatprep.subr.bf16.mxu0 0
  %985 = vmatpush1.bf16.msra.mxu0 %v911
  %986 = vmatprep.subr.bf16.mxu0 0
  %987 = vmatpush1.bf16.msra.mxu0 %v907
  %988 = vmatprep.subr.bf16.mxu0 0
  %989 = vmatpush1.bf16.msra.mxu0 %v903
  %990 = vmatprep.subr.bf16.mxu0 0
  %991 = vmatpush1.bf16.msra.mxu0 %v899
  %992 = vmatprep.subr.bf16.mxu0 0
  %993 = vmatpush1.bf16.msra.mxu0 %v895
  %994 = vmatprep.subr.bf16.mxu0 0
  %995 = vmatpush1.bf16.msra.mxu0 %v891
  %996 = vmatprep.subr.bf16.mxu0 0
  %997 = vmatpush1.bf16.msra.mxu0 %v887
  %998 = vmatprep.subr.bf16.mxu0 0
  %999 = vmatpush2.bf16.msra.mxu0 0
  %1000 = vmatprep.subr.bf16.mxu0 0
  %1001 = vmatpush2.bf16.msra.mxu0 0
  %1002 = vmatprep.subr.bf16.mxu0 0
  %1003 = vmatpush2.bf16.msra.mxu0 0
  %1004 = vmatprep.subr.bf16.mxu0 0
  %1005 = vmatpush2.bf16.msra.mxu0 %v980
  %1006 = vmatprep.subr.bf16.mxu0 0
  %1007 = vmatpush2.bf16.msra.mxu0 %v973
  %1008 = vmatprep.subr.bf16.mxu0 0
  %1009 = vmatpush2.bf16.msra.mxu0 %v972
  %1010 = vmatprep.subr.bf16.mxu0 0
  %1011 = vmatpush2.bf16.msra.mxu0 %v971
  %1012 = vmatprep.subr.bf16.mxu0 0
  %1013 = vmatpush2.bf16.msra.mxu0 %v970
  %1014 = vmatprep.mubr.bf16.mxu0 %v793
  %1015 = vmatmul.mubr.bf16.gmra.mxu0 %v788
  %v1016 = vpop.f32.mrf.mxu0
  %v1017 = vadd.f32 0.0, %v1016
  %v1018 = vpop.f32.mrf.mxu0
  %v1019 = vpop.f32.mrf.mxu0
  %v1020 = vadd.f32 0.0, %v1019
  %v1021 = vpop.f32.mrf.mxu0
  %1022 = vdwg.mxu0
  %1023 = vrot.lane.b32.xlu0 %v629, 112
  %v1024 = vpop.permute.xlu0 %1023
  %v1025 = vsel %vm672, %v866, %v1024
  %1026 = vrot.lane.b32.xlu0 %v629, 110
  %v1027 = vpop.permute.xlu0 %1026
  %v1028 = vsel %vm683, %v872, %v1027
  %1029 = vrot.lane.b32.xlu0 %v653, 110
  %v1030 = vpop.permute.xlu0 %1029
  %1031 = vrot.lane.b32.xlu0 %v855, 110
  %v1032 = vpop.permute.xlu0 %1031
  %v1033 = vsel %vm683, %v1030, %v1032
  %1034 = vrot.lane.b32.xlu0 %v629, 108
  %v1035 = vpop.permute.xlu0 %1034
  %v1036 = vsel %vm694, %v880, %v1035
  %1037 = vrot.lane.b32.xlu0 %v839, 96
  %v1038 = vpop.permute.xlu0 %1037
  %1039 = vrot.lane.b32.xlu0 %v631, 96
  %v1040 = vpop.permute.xlu0 %1039
  %vm1041 = vcmask 785408
  %v1042 = vsel %vm1041, %v1038, %v1040
  %v1044 = vsel %vm220, %v861, %v925
  %v1047 = vsel %vm220, %v1025, %v884
  %v1051 = vsel %vm220, %v1028, %v1033
  %v1055 = vsel %vm220, %v1036, %v1042
  %v1058 = vsel %vm220, %v628, %v642
  %v1061 = vsel %vm220, %v844, %v849
  %1066 = vrot.lane.b32.xlu0 %v887, 96
  %v1067 = vpop.permute.xlu0 %1066
  %1068 = vrot.lane.b32.xlu0 %v1058, 96
  %v1069 = vpop.permute.xlu0 %1068
  %1070 = vrot.lane.b32.xlu0 %v891, 96
  %v1071 = vpop.permute.xlu0 %1070
  %1072 = vrot.lane.b32.xlu0 %v1061, 96
  %v1073 = vpop.permute.xlu0 %1072
  %1074 = vrot.lane.b32.xlu0 %v927, 96
  %v1075 = vpop.permute.xlu0 %1074
  %1076 = vrot.lane.b32.xlu0 %v929, 96
  %v1077 = vpop.permute.xlu0 %1076
  %1078 = vrot.lane.b32.xlu0 %v899, 96
  %v1079 = vpop.permute.xlu0 %1078
  %1080 = vrot.lane.b32.xlu0 %v932, 96
  %v1081 = vpop.permute.xlu0 %1080
  %1082 = vrot.lane.b32.xlu0 %v861, 96
  %v1083 = vpop.permute.xlu0 %1082
  %1084 = vrot.lane.b32.xlu0 %v860, 96
  %v1085 = vpop.permute.xlu0 %1084
  %v1086 = vsel %vm1041, %v1067, %v1069
  %v1087 = vsel %vm1041, %v1071, %v1073
  %v1088 = vsel %vm1041, %v1075, %v1077
  %v1089 = vsel %vm1041, %v1079, %v1081
  %v1090 = vsel %vm1041, %v1083, %v1085
  %v1096 = vsel %vm220, %v1090, 0
  %1098 = vmatprep.subr.bf16.mxu0 0
  %1099 = vmatpush1.bf16.msra.mxu0 %v1055
  %1100 = vmatprep.subr.bf16.mxu0 0
  %1101 = vmatpush1.bf16.msra.mxu0 %v1051
  %1102 = vmatprep.subr.bf16.mxu0 0
  %1103 = vmatpush1.bf16.msra.mxu0 %v1047
  %1104 = vmatprep.subr.bf16.mxu0 0
  %1105 = vmatpush1.bf16.msra.mxu0 %v911
  %1106 = vmatprep.subr.bf16.mxu0 0
  %1107 = vmatpush1.bf16.msra.mxu0 %v907
  %1108 = vmatprep.subr.bf16.mxu0 0
  %1109 = vmatpush1.bf16.msra.mxu0 %v1044
  %1110 = vmatprep.subr.bf16.mxu0 0
  %1111 = vmatpush1.bf16.msra.mxu0 %v899
  %1112 = vmatprep.subr.bf16.mxu0 0
  %1113 = vmatpush1.bf16.msra.mxu0 %v927
  %1114 = vmatprep.subr.bf16.mxu0 0
  %1115 = vmatpush2.bf16.msra.mxu0 0
  %1116 = vmatprep.subr.bf16.mxu0 0
  %1117 = vmatpush2.bf16.msra.mxu0 0
  %1118 = vmatprep.subr.bf16.mxu0 0
  %1119 = vmatpush2.bf16.msra.mxu0 0
  %1120 = vmatprep.subr.bf16.mxu0 0
  %1121 = vmatpush2.bf16.msra.mxu0 %v1096
  %1122 = vmatprep.subr.bf16.mxu0 0
  %1123 = vmatpush2.bf16.msra.mxu0 %v1089
  %1124 = vmatprep.subr.bf16.mxu0 0
  %1125 = vmatpush2.bf16.msra.mxu0 %v1088
  %1126 = vmatprep.subr.bf16.mxu0 0
  %1127 = vmatpush2.bf16.msra.mxu0 %v1087
  %1128 = vmatprep.subr.bf16.mxu0 0
  %1129 = vmatpush2.bf16.msra.mxu0 %v1086
  %1130 = vmatprep.mubr.bf16.mxu0 %v793
  %1131 = vmatmul.mubr.bf16.gmra.mxu0 %v788
  %v1132 = vpop.f32.mrf.mxu0
  %v1133 = vadd.f32 0.0, %v1132
  %v1134 = vpop.f32.mrf.mxu0
  %v1135 = vpop.f32.mrf.mxu0
  %v1136 = vadd.f32 0.0, %v1135
  %v1137 = vpop.f32.mrf.mxu0
  %1138 = vdwg.mxu0
  %1139 = vrot.lane.b32.xlu0 0, 124
  %v1140 = vpop.permute.xlu0 %1139
  %v1141 = vsel %vm650, %v860, %v1140
  %1142 = vrot.lane.b32.xlu0 %v640, 108
  %v1143 = vpop.permute.xlu0 %1142
  %v1144 = vsel %vm694, %v877, %v1143
  %1145 = vrot.lane.b32.xlu0 0, 112
  %v1146 = vpop.permute.xlu0 %1145
  %v1147 = vsel %vm672, %v1024, %v1146
  %v1148 = vsel %vm683, %v688, %v1030
  %1149 = vrot.lane.b32.xlu0 0, 110
  %v1150 = vpop.permute.xlu0 %1149
  %v1151 = vsel %vm683, %v1027, %v1150
  %1152 = vrot.lane.b32.xlu0 %v653, 108
  %v1153 = vpop.permute.xlu0 %1152
  %v1154 = vsel %vm694, %v1143, %v1153
  %1155 = vrot.lane.b32.xlu0 0, 108
  %v1156 = vpop.permute.xlu0 %1155
  %v1157 = vsel %vm694, %v1035, %v1156
  %1158 = vrot.lane.b32.xlu0 %v640, 96
  %v1159 = vpop.permute.xlu0 %1158
  %v1160 = vsel %vm1041, %v1040, %v1159
  %v1162 = vsel %vm220, %v1141, %v678
  %v1165 = vsel %vm220, %v695, %v1144
  %v1169 = vsel %vm220, %v1147, %v1148
  %v1173 = vsel %vm220, %v1151, %v1154
  %v1177 = vsel %vm220, %v1157, %v1160
  %1179 = vrot.lane.b32.xlu0 %v629, 2
  %v1180 = vpop.permute.xlu0 %1179
  %1181 = vrot.lane.b32.xlu0 0, 2
  %v1182 = vpop.permute.xlu0 %1181
  %vm1183 = vcmask 15360
  %v1184 = vsel %vm1183, %v1180, %v1182
  %v1185 = vsel %vm220, %v627, %v640
  %v1188 = vsel %vm220, %v636, %v644
  %v1190 = vsel %vm220, %v1180, %v640
  %v1192 = vsel %vm220, %v1184, %v653
  %1199 = vrot.lane.b32.xlu0 %v701, 94
  %v1200 = vpop.permute.xlu0 %1199
  %1201 = vrot.lane.b32.xlu0 %v1185, 94
  %v1202 = vpop.permute.xlu0 %1201
  %1203 = vrot.lane.b32.xlu0 %v705, 94
  %v1204 = vpop.permute.xlu0 %1203
  %1205 = vrot.lane.b32.xlu0 %v1188, 94
  %v1206 = vpop.permute.xlu0 %1205
  %1207 = vrot.lane.b32.xlu0 %v1190, 94
  %v1208 = vpop.permute.xlu0 %1207
  %1209 = vrot.lane.b32.xlu0 %v1192, 94
  %v1210 = vpop.permute.xlu0 %1209
  %1211 = vrot.lane.b32.xlu0 %v713, 94
  %v1212 = vpop.permute.xlu0 %1211
  %1213 = vrot.lane.b32.xlu0 %v733, 94
  %v1214 = vpop.permute.xlu0 %1213
  %1215 = vrot.lane.b32.xlu0 %v662, 94
  %v1216 = vpop.permute.xlu0 %1215
  %1217 = vrot.lane.b32.xlu0 %v661, 94
  %v1218 = vpop.permute.xlu0 %1217
  %vm1219 = vcmask 769024
  %v1220 = vsel %vm1219, %v1200, %v1202
  %v1221 = vsel %vm1219, %v1204, %v1206
  %v1222 = vsel %vm1219, %v1208, %v1210
  %v1223 = vsel %vm1219, %v1212, %v1214
  %v1224 = vsel %vm1219, %v1216, %v1218
  %v1230 = vsel %vm220, %v1224, 0
  %1232 = vmatprep.subr.bf16.mxu0 0
  %1233 = vmatpush1.bf16.msra.mxu0 %v1177
  %1234 = vmatprep.subr.bf16.mxu0 0
  %1235 = vmatpush1.bf16.msra.mxu0 %v1173
  %1236 = vmatprep.subr.bf16.mxu0 0
  %1237 = vmatpush1.bf16.msra.mxu0 %v1169
  %1238 = vmatprep.subr.bf16.mxu0 0
  %1239 = vmatpush1.bf16.msra.mxu0 %v1165
  %1240 = vmatprep.subr.bf16.mxu0 0
  %1241 = vmatpush1.bf16.msra.mxu0 %v725
  %1242 = vmatprep.subr.bf16.mxu0 0
  %1243 = vmatpush1.bf16.msra.mxu0 %v1162
  %1244 = vmatprep.subr.bf16.mxu0 0
  %1245 = vmatpush1.bf16.msra.mxu0 %v717
  %1246 = vmatprep.subr.bf16.mxu0 0
  %1247 = vmatpush1.bf16.msra.mxu0 %v713
  %1248 = vmatprep.subr.bf16.mxu0 0
  %1249 = vmatpush2.bf16.msra.mxu0 0
  %1250 = vmatprep.subr.bf16.mxu0 0
  %1251 = vmatpush2.bf16.msra.mxu0 0
  %1252 = vmatprep.subr.bf16.mxu0 0
  %1253 = vmatpush2.bf16.msra.mxu0 0
  %1254 = vmatprep.subr.bf16.mxu0 0
  %1255 = vmatpush2.bf16.msra.mxu0 %v1230
  %1256 = vmatprep.subr.bf16.mxu0 0
  %1257 = vmatpush2.bf16.msra.mxu0 %v1223
  %1258 = vmatprep.subr.bf16.mxu0 0
  %1259 = vmatpush2.bf16.msra.mxu0 %v1222
  %1260 = vmatprep.subr.bf16.mxu0 0
  %1261 = vmatpush2.bf16.msra.mxu0 %v1221
  %1262 = vmatprep.subr.bf16.mxu0 0
  %1263 = vmatpush2.bf16.msra.mxu0 %v1220
  %1264 = vmatprep.mubr.bf16.mxu0 %v793
  %1265 = vmatmul.mubr.bf16.gmra.mxu0 %v788
  %v1266 = vpop.f32.mrf.mxu0
  %v1267 = vadd.f32 0.0, %v1266
  %v1268 = vpop.f32.mrf.mxu0
  %v1269 = vpop.f32.mrf.mxu0
  %v1270 = vadd.f32 0.0, %v1269
  %v1271 = vpop.f32.mrf.mxu0
  %1272 = vdwg.mxu0
  %v1273 = vmax.f32 %v833, %v1017
  %v1274 = vmax.f32 %v836, %v1020
  %v1275 = vmax.f32 %v1133, %v1267
  %v1276 = vmax.f32 %v1136, %v1270
  %v1277 = vmax.f32 %v1273, %v1275
  %v1278 = vmax.f32 %v1274, %v1276
  %v1279 = vld [vmem:[%s4] sm:$0xff]
  %v1280 = vld [vmem:[%s4 + $0x8] sm:$0xff]
  %1282 = vset.pattern.permute.xlu0 0
  %1283 = vperm.xlu0 %1282, %v1279
  %v1284 = vpop.permute.xlu0 %1283
  %1287 = vset.pattern.permute.xlu0 0
  %1288 = vperm.xlu0 %1287, %v1280
  %v1289 = vpop.permute.xlu0 %1288
  %v1291 = vadd.f32 %v1277, %v1284
  %v1292 = vadd.f32 %v1278, %v1289
  %v1293 = vmax.f32 %v1291, 0.0
  %v1294 = vmax.f32 %v1292, 0.0
  %v1295 = vpack.c.bf16 %v1294, %v1293
  %1297 = vrot.lane.b32.xlu0 %v1295, 126
  %v1298 = vpop.permute.xlu0 %1297
  %1300 = vrot.lane.b32.xlu0 %v1295, 124
  %v1301 = vpop.permute.xlu0 %1300
  %1303 = vrot.lane.b32.xlu0 %v1295, 122
  %v1304 = vpop.permute.xlu0 %1303
  %1306 = vrot.lane.b32.xlu0 %v1295, 120
  %v1307 = vpop.permute.xlu0 %1306
  %1309 = vrot.lane.b32.xlu0 %v1295, 112
  %v1310 = vpop.permute.xlu0 %1309
  %1312 = vrot.lane.b32.xlu0 %v1295, 110
  %v1313 = vpop.permute.xlu0 %1312
  %1315 = vrot.lane.b32.xlu0 %v1295, 108
  %v1316 = vpop.permute.xlu0 %1315
  %1318 = vrot.lane.b32.xlu0 %v1295, 106
  %v1319 = vpop.permute.xlu0 %1318
  %1321 = vrot.lane.b32.xlu0 %v1295, 104
  %v1322 = vpop.permute.xlu0 %1321
  %1324 = vrot.lane.b32.xlu0 %v1295, 96
  %v1325 = vpop.permute.xlu0 %1324
  %1327 = vrot.lane.b32.xlu0 %v1295, 94
  %v1328 = vpop.permute.xlu0 %1327
  %1330 = vrot.lane.b32.xlu0 %v1295, 92
  %v1331 = vpop.permute.xlu0 %1330
  %1333 = vrot.lane.b32.xlu0 %v1295, 90
  %v1334 = vpop.permute.xlu0 %1333
  %1336 = vrot.lane.b32.xlu0 %v1295, 88
  %v1337 = vpop.permute.xlu0 %1336
  %1339 = vrot.lane.b32.xlu0 %v1295, 80
  %v1340 = vpop.permute.xlu0 %1339
  %1342 = vrot.lane.b32.xlu0 %v1295, 114
  %v1343 = vpop.permute.xlu0 %1342
  %1344 = vrot.lane.b32.xlu0 %v1295, 78
  %v1345 = vpop.permute.xlu0 %1344
  %1346 = vrot.lane.b32.xlu0 %v1298, 78
  %v1347 = vpop.permute.xlu0 %1346
  %1348 = vrot.lane.b32.xlu0 %v1301, 78
  %v1349 = vpop.permute.xlu0 %1348
  %1350 = vrot.lane.b32.xlu0 %v1304, 78
  %v1351 = vpop.permute.xlu0 %1350
  %1352 = vrot.lane.b32.xlu0 %v1343, 78
  %v1353 = vpop.permute.xlu0 %1352
  %1354 = vrot.lane.b32.xlu0 %v1310, 78
  %v1355 = vpop.permute.xlu0 %1354
  %1356 = vrot.lane.b32.xlu0 %v1313, 78
  %v1357 = vpop.permute.xlu0 %1356
  %1358 = vrot.lane.b32.xlu0 %v1316, 78
  %v1359 = vpop.permute.xlu0 %1358
  %1360 = vrot.lane.b32.xlu0 %v1319, 78
  %v1361 = vpop.permute.xlu0 %1360
  %v1371 = vld [vmem:[%s5] sm:$0xff]
  %v1372 = vld [vmem:[%s5 + $0x8] sm:$0xff]
  %v1373 = vld [vmem:[%s5 + $0x10] sm:$0xff]
  %v1374 = vld [vmem:[%s5 + $0x18] sm:$0xff]
  %v1375 = vld [vmem:[%s5 + $0x20] sm:$0xff]
  %v1376 = vld [vmem:[%s5 + $0x28] sm:$0xff]
  %v1377 = vld [vmem:[%s5 + $0x30] sm:$0xff]
  %v1378 = vld [vmem:[%s5 + $0x38] sm:$0xff]
  %v1379 = vld [vmem:[%s5 + $0x40] sm:$0xff]
  %v1380 = vld [vmem:[%s5 + $0x48] sm:$0xff]
  %v1381 = vld [vmem:[%s5 + $0x50] sm:$0xff]
  %v1382 = vld [vmem:[%s5 + $0x58] sm:$0xff]
  %v1383 = vld [vmem:[%s5 + $0x60] sm:$0xff]
  %v1384 = vld [vmem:[%s5 + $0x68] sm:$0xff]
  %v1385 = vld [vmem:[%s5 + $0x70] sm:$0xff]
  %v1386 = vld [vmem:[%s5 + $0x78] sm:$0xff]
  %v1387 = vld [vmem:[%s5 + $0x80] sm:$0xff]
  %v1388 = vld [vmem:[%s5 + $0x88] sm:$0xff]
  %v1389 = vld [vmem:[%s5 + $0x90] sm:$0xff]
  %v1390 = vld [vmem:[%s5 + $0x98] sm:$0xff]
  %v1391 = vld [vmem:[%s5 + $0xa0] sm:$0xff]
  %v1392 = vld [vmem:[%s5 + $0xa8] sm:$0xff]
  %v1393 = vld [vmem:[%s5 + $0xb0] sm:$0xff]
  %v1394 = vld [vmem:[%s5 + $0xb8] sm:$0xff]
  %v1395 = vld [vmem:[%s5 + $0xc0] sm:$0xff]
  %v1396 = vld [vmem:[%s5 + $0xc8] sm:$0xff]
  %v1397 = vld [vmem:[%s5 + $0xd0] sm:$0xff]
  %v1398 = vld [vmem:[%s5 + $0xd8] sm:$0xff]
  %v1399 = vld [vmem:[%s5 + $0xe0] sm:$0xff]
  %v1400 = vld [vmem:[%s5 + $0xe8] sm:$0xff]
  %v1401 = vld [vmem:[%s5 + $0xf0] sm:$0xff]
  %v1402 = vld [vmem:[%s5 + $0xf8] sm:$0xff]
  %v1403 = vld [vmem:[%s6] sm:$0xff]
  %v1404 = vld [vmem:[%s6 + $0x8] sm:$0xff]
  %v1405 = vld [vmem:[%s6 + $0x10] sm:$0xff]
  %v1406 = vld [vmem:[%s6 + $0x18] sm:$0xff]
  %v1407 = vld [vmem:[%s6 + $0x20] sm:$0xff]
  %v1408 = vld [vmem:[%s6 + $0x28] sm:$0xff]
  %v1409 = vld [vmem:[%s6 + $0x30] sm:$0xff]
  %v1410 = vld [vmem:[%s6 + $0x38] sm:$0xff]
  %v1411 = vld [vmem:[%s6 + $0x40] sm:$0xff]
  %v1412 = vld [vmem:[%s6 + $0x48] sm:$0xff]
  %v1413 = vld [vmem:[%s6 + $0x50] sm:$0xff]
  %v1414 = vld [vmem:[%s6 + $0x58] sm:$0xff]
  %v1415 = vld [vmem:[%s6 + $0x60] sm:$0xff]
  %v1416 = vld [vmem:[%s6 + $0x68] sm:$0xff]
  %v1417 = vld [vmem:[%s6 + $0x70] sm:$0xff]
  %v1418 = vld [vmem:[%s6 + $0x78] sm:$0xff]
  %1420 = vset.pattern.permute.xlu0 0
  %1421 = vperm.xlu0 %1420, %v1403
  %v1422 = vpop.permute.xlu0 %1421
  %1425 = vset.pattern.permute.xlu0 0
  %1426 = vperm.xlu0 %1425, %v1404
  %v1427 = vpop.permute.xlu0 %1426
  %1430 = vset.pattern.permute.xlu0 0
  %1431 = vperm.xlu0 %1430, %v1405
  %v1432 = vpop.permute.xlu0 %1431
  %1435 = vset.pattern.permute.xlu0 0
  %1436 = vperm.xlu0 %1435, %v1406
  %v1437 = vpop.permute.xlu0 %1436
  %1440 = vset.pattern.permute.xlu0 0
  %1441 = vperm.xlu0 %1440, %v1407
  %v1442 = vpop.permute.xlu0 %1441
  %1445 = vset.pattern.permute.xlu0 0
  %1446 = vperm.xlu0 %1445, %v1408
  %v1447 = vpop.permute.xlu0 %1446
  %1450 = vset.pattern.permute.xlu0 0
  %1451 = vperm.xlu0 %1450, %v1409
  %v1452 = vpop.permute.xlu0 %1451
  %1455 = vset.pattern.permute.xlu0 0
  %1456 = vperm.xlu0 %1455, %v1410
  %v1457 = vpop.permute.xlu0 %1456
  %1460 = vset.pattern.permute.xlu0 0
  %1461 = vperm.xlu0 %1460, %v1411
  %v1462 = vpop.permute.xlu0 %1461
  %1465 = vset.pattern.permute.xlu0 0
  %1466 = vperm.xlu0 %1465, %v1412
  %v1467 = vpop.permute.xlu0 %1466
  %1470 = vset.pattern.permute.xlu0 0
  %1471 = vperm.xlu0 %1470, %v1413
  %v1472 = vpop.permute.xlu0 %1471
  %1475 = vset.pattern.permute.xlu0 0
  %1476 = vperm.xlu0 %1475, %v1414
  %v1477 = vpop.permute.xlu0 %1476
  %1480 = vset.pattern.permute.xlu0 0
  %1481 = vperm.xlu0 %1480, %v1415
  %v1482 = vpop.permute.xlu0 %1481
  %1485 = vset.pattern.permute.xlu0 0
  %1486 = vperm.xlu0 %1485, %v1416
  %v1487 = vpop.permute.xlu0 %1486
  %1490 = vset.pattern.permute.xlu0 0
  %1491 = vperm.xlu0 %1490, %v1417
  %v1492 = vpop.permute.xlu0 %1491
  %1495 = vset.pattern.permute.xlu0 0
  %1496 = vperm.xlu0 %1495, %v1418
  %v1497 = vpop.permute.xlu0 %1496
  %v1531 = vunpack.c.l.b16 %v1371
  %v1532 = vunpack.c.h.b16 %v1371
  %v1533 = vunpack.c.l.b16 %v1372
  %v1534 = vunpack.c.h.b16 %v1372
  %v1535 = vunpack.c.l.b16 %v1373
  %v1536 = vunpack.c.h.b16 %v1373
  %v1537 = vunpack.c.l.b16 %v1374
  %v1538 = vunpack.c.h.b16 %v1374
  %v1539 = vunpack.c.l.b16 %v1375
  %v1540 = vunpack.c.h.b16 %v1375
  %v1541 = vunpack.c.l.b16 %v1376
  %v1542 = vunpack.c.h.b16 %v1376
  %v1543 = vunpack.c.l.b16 %v1377
  %v1544 = vunpack.c.h.b16 %v1377
  %v1545 = vunpack.c.l.b16 %v1378
  %v1546 = vunpack.c.h.b16 %v1378
  %v1547 = vunpack.c.l.b16 %v1379
  %v1548 = vunpack.c.h.b16 %v1379
  %v1549 = vunpack.c.l.b16 %v1380
  %v1550 = vunpack.c.h.b16 %v1380
  %v1551 = vunpack.c.l.b16 %v1381
  %v1552 = vunpack.c.h.b16 %v1381
  %v1553 = vunpack.c.l.b16 %v1382
  %v1554 = vunpack.c.h.b16 %v1382
  %v1555 = vunpack.c.l.b16 %v1383
  %v1556 = vunpack.c.h.b16 %v1383
  %v1557 = vunpack.c.l.b16 %v1384
  %v1558 = vunpack.c.h.b16 %v1384
  %v1559 = vunpack.c.l.b16 %v1385
  %v1560 = vunpack.c.h.b16 %v1385
  %v1561 = vunpack.c.l.b16 %v1386
  %v1562 = vunpack.c.h.b16 %v1386
  %v1563 = vunpack.c.l.b16 %v1387
  %v1564 = vunpack.c.h.b16 %v1387
  %v1565 = vunpack.c.l.b16 %v1388
  %v1566 = vunpack.c.h.b16 %v1388
  %v1567 = vunpack.c.l.b16 %v1389
  %v1568 = vunpack.c.h.b16 %v1389
  %v1569 = vunpack.c.l.b16 %v1390
  %v1570 = vunpack.c.h.b16 %v1390
  %v1571 = vunpack.c.l.b16 %v1391
  %v1572 = vunpack.c.h.b16 %v1391
  %v1573 = vunpack.c.l.b16 %v1392
  %v1574 = vunpack.c.h.b16 %v1392
  %v1575 = vunpack.c.l.b16 %v1393
  %v1576 = vunpack.c.h.b16 %v1393
  %v1577 = vunpack.c.l.b16 %v1394
  %v1578 = vunpack.c.h.b16 %v1394
  %v1579 = vunpack.c.l.b16 %v1395
  %v1580 = vunpack.c.h.b16 %v1395
  %v1581 = vunpack.c.l.b16 %v1396
  %v1582 = vunpack.c.h.b16 %v1396
  %v1583 = vunpack.c.l.b16 %v1397
  %v1584 = vunpack.c.h.b16 %v1397
  %v1585 = vunpack.c.l.b16 %v1398
  %v1586 = vunpack.c.h.b16 %v1398
  %v1587 = vunpack.c.l.b16 %v1399
  %v1588 = vunpack.c.h.b16 %v1399
  %v1589 = vunpack.c.l.b16 %v1400
  %v1590 = vunpack.c.h.b16 %v1400
  %v1591 = vunpack.c.l.b16 %v1401
  %v1592 = vunpack.c.h.b16 %v1401
  %v1593 = vunpack.c.l.b16 %v1402
  %v1594 = vunpack.c.h.b16 %v1402
  %v1595 = vpack.c.b16 %v1535, %v1531
  %v1596 = vpack.c.b16 %v1536, %v1532
  %v1597 = vpack.c.b16 %v1537, %v1533
  %v1598 = vpack.c.b16 %v1538, %v1534
  %v1599 = vpack.c.b16 %v1543, %v1539
  %v1600 = vpack.c.b16 %v1544, %v1540
  %v1601 = vpack.c.b16 %v1545, %v1541
  %v1602 = vpack.c.b16 %v1546, %v1542
  %v1603 = vpack.c.b16 %v1551, %v1547
  %v1604 = vpack.c.b16 %v1552, %v1548
  %v1605 = vpack.c.b16 %v1553, %v1549
  %v1606 = vpack.c.b16 %v1554, %v1550
  %v1607 = vpack.c.b16 %v1559, %v1555
  %v1608 = vpack.c.b16 %v1560, %v1556
  %v1609 = vpack.c.b16 %v1561, %v1557
  %v1610 = vpack.c.b16 %v1562, %v1558
  %v1611 = vpack.c.b16 %v1567, %v1563
  %v1612 = vpack.c.b16 %v1568, %v1564
  %v1613 = vpack.c.b16 %v1569, %v1565
  %v1614 = vpack.c.b16 %v1570, %v1566
  %v1615 = vpack.c.b16 %v1575, %v1571
  %v1616 = vpack.c.b16 %v1576, %v1572
  %v1617 = vpack.c.b16 %v1577, %v1573
  %v1618 = vpack.c.b16 %v1578, %v1574
  %v1619 = vpack.c.b16 %v1583, %v1579
  %v1620 = vpack.c.b16 %v1584, %v1580
  %v1621 = vpack.c.b16 %v1585, %v1581
  %v1622 = vpack.c.b16 %v1586, %v1582
  %v1623 = vpack.c.b16 %v1591, %v1587
  %v1624 = vpack.c.b16 %v1592, %v1588
  %v1625 = vpack.c.b16 %v1593, %v1589
  %v1626 = vpack.c.b16 %v1594, %v1590
  %vm1651 = vcmask 130048
  %v1653 = vsel %vm1651, %v1598, 0
  %v1656 = vsel %vm1651, %v1602, 0
  %v1659 = vsel %vm1651, %v1606, 0
  %v1662 = vsel %vm1651, %v1610, 0
  %v1665 = vsel %vm1651, %v1614, 0
  %v1668 = vsel %vm1651, %v1618, 0
  %v1671 = vsel %vm1651, %v1622, 0
  %v1674 = vsel %vm1651, %v1626, 0
  %1676 = vmatprep.subr.bf16.mxu0 0
  %1677 = vmatpush1.bf16.msra.mxu0 %v1316
  %1678 = vmatprep.subr.bf16.mxu0 0
  %1679 = vmatpush1.bf16.msra.mxu0 %v1313
  %1680 = vmatprep.subr.bf16.mxu0 0
  %1681 = vmatpush1.bf16.msra.mxu0 %v1310
  %1682 = vmatprep.subr.bf16.mxu0 0
  %1683 = vmatpush1.bf16.msra.mxu0 %v1307
  %1684 = vmatprep.subr.bf16.mxu0 0
  %1685 = vmatpush1.bf16.msra.mxu0 %v1304
  %1686 = vmatprep.subr.bf16.mxu0 0
  %1687 = vmatpush1.bf16.msra.mxu0 %v1301
  %1688 = vmatprep.subr.bf16.mxu0 0
  %1689 = vmatpush1.bf16.msra.mxu0 %v1298
  %1690 = vmatprep.subr.bf16.mxu0 0
  %1691 = vmatpush1.bf16.msra.mxu0 %v1295
  %1692 = vmatprep.subr.bf16.mxu0 0
  %1693 = vmatpush2.bf16.msra.mxu0 %v1340
  %1694 = vmatprep.subr.bf16.mxu0 0
  %1695 = vmatpush2.bf16.msra.mxu0 %v1337
  %1696 = vmatprep.subr.bf16.mxu0 0
  %1697 = vmatpush2.bf16.msra.mxu0 %v1334
  %1698 = vmatprep.subr.bf16.mxu0 0
  %1699 = vmatpush2.bf16.msra.mxu0 %v1331
  %1700 = vmatprep.subr.bf16.mxu0 0
  %1701 = vmatpush2.bf16.msra.mxu0 %v1328
  %1702 = vmatprep.subr.bf16.mxu0 0
  %1703 = vmatpush2.bf16.msra.mxu0 %v1325
  %1704 = vmatprep.subr.bf16.mxu0 0
  %1705 = vmatpush2.bf16.msra.mxu0 %v1322
  %1706 = vmatprep.subr.bf16.mxu0 0
  %1707 = vmatpush2.bf16.msra.mxu0 %v1319
  %1708 = vmatprep.mubr.bf16.mxu0 %v1596
  %1709 = vmatmul.mubr.bf16.gmra.mxu0 %v1595
  %v1710 = vpop.f32.mrf.mxu0
  %v1711 = vadd.f32 %v1422, %v1710
  %v1712 = vpop.f32.mrf.mxu0
  %v1713 = vpop.f32.mrf.mxu0
  %v1714 = vadd.f32 %v1427, %v1713
  %v1715 = vpop.f32.mrf.mxu0
  %1716 = vmatprep.mubr.bf16.mxu0 %v1600
  %1717 = vmatmul.mubr.bf16.gmra.mxu0 %v1599
  %v1718 = vpop.f32.mrf.mxu0
  %v1719 = vadd.f32 %v1432, %v1718
  %v1720 = vpop.f32.mrf.mxu0
  %v1721 = vpop.f32.mrf.mxu0
  %v1722 = vadd.f32 %v1437, %v1721
  %v1723 = vpop.f32.mrf.mxu0
  %1724 = vmatprep.mubr.bf16.mxu0 %v1604
  %1725 = vmatmul.mubr.bf16.gmra.mxu0 %v1603
  %v1726 = vpop.f32.mrf.mxu0
  %v1727 = vadd.f32 %v1442, %v1726
  %v1728 = vpop.f32.mrf.mxu0
  %v1729 = vpop.f32.mrf.mxu0
  %v1730 = vadd.f32 %v1447, %v1729
  %v1731 = vpop.f32.mrf.mxu0
  %1732 = vmatprep.mubr.bf16.mxu0 %v1608
  %1733 = vmatmul.mubr.bf16.gmra.mxu0 %v1607
  %v1734 = vpop.f32.mrf.mxu0
  %v1735 = vadd.f32 %v1452, %v1734
  %v1736 = vpop.f32.mrf.mxu0
  %v1737 = vpop.f32.mrf.mxu0
  %v1738 = vadd.f32 %v1457, %v1737
  %v1739 = vpop.f32.mrf.mxu0
  %1740 = vmatprep.mubr.bf16.mxu0 %v1612
  %1741 = vmatmul.mubr.bf16.gmra.mxu0 %v1611
  %v1742 = vpop.f32.mrf.mxu0
  %v1743 = vadd.f32 %v1462, %v1742
  %v1744 = vpop.f32.mrf.mxu0
  %v1745 = vpop.f32.mrf.mxu0
  %v1746 = vadd.f32 %v1467, %v1745
  %v1747 = vpop.f32.mrf.mxu0
  %1748 = vmatprep.mubr.bf16.mxu0 %v1616
  %1749 = vmatmul.mubr.bf16.gmra.mxu0 %v1615
  %v1750 = vpop.f32.mrf.mxu0
  %v1751 = vadd.f32 %v1472, %v1750
  %v1752 = vpop.f32.mrf.mxu0
  %v1753 = vpop.f32.mrf.mxu0
  %v1754 = vadd.f32 %v1477, %v1753
  %v1755 = vpop.f32.mrf.mxu0
  %1756 = vmatprep.mubr.bf16.mxu0 %v1620
  %1757 = vmatmul.mubr.bf16.gmra.mxu0 %v1619
  %v1758 = vpop.f32.mrf.mxu0
  %v1759 = vadd.f32 %v1482, %v1758
  %v1760 = vpop.f32.mrf.mxu0
  %v1761 = vpop.f32.mrf.mxu0
  %v1762 = vadd.f32 %v1487, %v1761
  %v1763 = vpop.f32.mrf.mxu0
  %1764 = vmatprep.mubr.bf16.mxu0 %v1624
  %1765 = vmatmul.mubr.bf16.gmra.mxu0 %v1623
  %v1766 = vpop.f32.mrf.mxu0
  %v1767 = vadd.f32 %v1492, %v1766
  %v1768 = vpop.f32.mrf.mxu0
  %v1769 = vpop.f32.mrf.mxu0
  %v1770 = vadd.f32 %v1497, %v1769
  %v1771 = vpop.f32.mrf.mxu0
  %1772 = vdwg.mxu0
  %1773 = vmatprep.subr.bf16.mxu0 0
  %1774 = vmatpush1.bf16.msra.mxu0 %v1359
  %1775 = vmatprep.subr.bf16.mxu0 0
  %1776 = vmatpush1.bf16.msra.mxu0 %v1357
  %1777 = vmatprep.subr.bf16.mxu0 0
  %1778 = vmatpush1.bf16.msra.mxu0 %v1355
  %1779 = vmatprep.subr.bf16.mxu0 0
  %1780 = vmatpush1.bf16.msra.mxu0 %v1353
  %1781 = vmatprep.subr.bf16.mxu0 0
  %1782 = vmatpush1.bf16.msra.mxu0 %v1351
  %1783 = vmatprep.subr.bf16.mxu0 0
  %1784 = vmatpush1.bf16.msra.mxu0 %v1349
  %1785 = vmatprep.subr.bf16.mxu0 0
  %1786 = vmatpush1.bf16.msra.mxu0 %v1347
  %1787 = vmatprep.subr.bf16.mxu0 0
  %1788 = vmatpush1.bf16.msra.mxu0 %v1345
  %1789 = vmatprep.subr.bf16.mxu0 0
  %1790 = vmatpush2.bf16.msra.mxu0 0
  %1791 = vmatprep.subr.bf16.mxu0 0
  %1792 = vmatpush2.bf16.msra.mxu0 0
  %1793 = vmatprep.subr.bf16.mxu0 0
  %1794 = vmatpush2.bf16.msra.mxu0 0
  %1795 = vmatprep.subr.bf16.mxu0 0
  %1796 = vmatpush2.bf16.msra.mxu0 0
  %1797 = vmatprep.subr.bf16.mxu0 0
  %1798 = vmatpush2.bf16.msra.mxu0 0
  %1799 = vmatprep.subr.bf16.mxu0 0
  %1800 = vmatpush2.bf16.msra.mxu0 0
  %1801 = vmatprep.subr.bf16.mxu0 0
  %1802 = vmatpush2.bf16.msra.mxu0 0
  %1803 = vmatprep.subr.bf16.mxu0 0
  %1804 = vmatpush2.bf16.msra.mxu0 %v1361
  %1805 = vmatprep.mubr.bf16.mxu0 %v1653
  %1806 = vmatmul.mubr.bf16.gmra.mxu0 %v1597
  %v1807 = vpop.f32.mrf.mxu0
  %v1808 = vadd.f32 %v1711, %v1807
  %v1809 = vpop.f32.mrf.mxu0
  %v1810 = vpop.f32.mrf.mxu0
  %v1811 = vadd.f32 %v1714, %v1810
  %v1812 = vpop.f32.mrf.mxu0
  %1813 = vmatprep.mubr.bf16.mxu0 %v1656
  %1814 = vmatmul.mubr.bf16.gmra.mxu0 %v1601
  %v1815 = vpop.f32.mrf.mxu0
  %v1816 = vadd.f32 %v1719, %v1815
  %v1817 = vpop.f32.mrf.mxu0
  %v1818 = vpop.f32.mrf.mxu0
  %v1819 = vadd.f32 %v1722, %v1818
  %v1820 = vpop.f32.mrf.mxu0
  %1821 = vmatprep.mubr.bf16.mxu0 %v1659
  %1822 = vmatmul.mubr.bf16.gmra.mxu0 %v1605
  %v1823 = vpop.f32.mrf.mxu0
  %v1824 = vadd.f32 %v1727, %v1823
  %v1825 = vpop.f32.mrf.mxu0
  %v1826 = vpop.f32.mrf.mxu0
  %v1827 = vadd.f32 %v1730, %v1826
  %v1828 = vpop.f32.mrf.mxu0
  %1829 = vmatprep.mubr.bf16.mxu0 %v1662
  %1830 = vmatmul.mubr.bf16.gmra.mxu0 %v1609
  %v1831 = vpop.f32.mrf.mxu0
  %v1832 = vadd.f32 %v1735, %v1831
  %v1833 = vpop.f32.mrf.mxu0
  %v1834 = vpop.f32.mrf.mxu0
  %v1835 = vadd.f32 %v1738, %v1834
  %v1836 = vpop.f32.mrf.mxu0
  %1837 = vmatprep.mubr.bf16.mxu0 %v1665
  %1838 = vmatmul.mubr.bf16.gmra.mxu0 %v1613
  %v1839 = vpop.f32.mrf.mxu0
  %v1840 = vadd.f32 %v1743, %v1839
  %v1841 = vpop.f32.mrf.mxu0
  %v1842 = vpop.f32.mrf.mxu0
  %v1843 = vadd.f32 %v1746, %v1842
  %v1844 = vpop.f32.mrf.mxu0
  %1845 = vmatprep.mubr.bf16.mxu0 %v1668
  %1846 = vmatmul.mubr.bf16.gmra.mxu0 %v1617
  %v1847 = vpop.f32.mrf.mxu0
  %v1848 = vadd.f32 %v1751, %v1847
  %v1849 = vpop.f32.mrf.mxu0
  %v1850 = vpop.f32.mrf.mxu0
  %v1851 = vadd.f32 %v1754, %v1850
  %v1852 = vpop.f32.mrf.mxu0
  %1853 = vmatprep.mubr.bf16.mxu0 %v1671
  %1854 = vmatmul.mubr.bf16.gmra.mxu0 %v1621
  %v1855 = vpop.f32.mrf.mxu0
  %v1856 = vadd.f32 %v1759, %v1855
  %v1857 = vpop.f32.mrf.mxu0
  %v1858 = vpop.f32.mrf.mxu0
  %v1859 = vadd.f32 %v1762, %v1858
  %v1860 = vpop.f32.mrf.mxu0
  %1861 = vmatprep.mubr.bf16.mxu0 %v1674
  %1862 = vmatmul.mubr.bf16.gmra.mxu0 %v1625
  %v1863 = vpop.f32.mrf.mxu0
  %v1864 = vadd.f32 %v1767, %v1863
  %v1865 = vpop.f32.mrf.mxu0
  %v1866 = vpop.f32.mrf.mxu0
  %v1867 = vadd.f32 %v1770, %v1866
  %v1868 = vpop.f32.mrf.mxu0
  %1869 = vdwg.mxu0
  %v1870 = vmax.f32 %v1808, 0.0
  %v1871 = vmax.f32 %v1811, 0.0
  %v1872 = vmax.f32 %v1816, 0.0
  %v1873 = vmax.f32 %v1819, 0.0
  %v1874 = vmax.f32 %v1824, 0.0
  %v1875 = vmax.f32 %v1827, 0.0
  %v1876 = vmax.f32 %v1832, 0.0
  %v1877 = vmax.f32 %v1835, 0.0
  %v1878 = vmax.f32 %v1840, 0.0
  %v1879 = vmax.f32 %v1843, 0.0
  %v1880 = vmax.f32 %v1848, 0.0
  %v1881 = vmax.f32 %v1851, 0.0
  %v1882 = vmax.f32 %v1856, 0.0
  %v1883 = vmax.f32 %v1859, 0.0
  %v1884 = vmax.f32 %v1864, 0.0
  %v1885 = vmax.f32 %v1867, 0.0
  %v1886 = vld [vmem:[%s7] sm:$0xf]
  %v1887 = vld [vmem:[%s7 + $0x4] sm:$0xf]
  %v1888 = vld [vmem:[%s7 + $0x8] sm:$0xf]
  %v1889 = vld [vmem:[%s7 + $0xc] sm:$0xf]
  %v1890 = vld [vmem:[%s7 + $0x10] sm:$0xf]
  %v1891 = vld [vmem:[%s7 + $0x14] sm:$0xf]
  %v1892 = vld [vmem:[%s7 + $0x18] sm:$0xf]
  %v1893 = vld [vmem:[%s7 + $0x1c] sm:$0xf]
  %v1894 = vld [vmem:[%s7 + $0x20] sm:$0xf]
  %v1895 = vld [vmem:[%s7 + $0x24] sm:$0xf]
  %v1896 = vld [vmem:[%s7 + $0x28] sm:$0xf]
  %v1897 = vld [vmem:[%s7 + $0x2c] sm:$0xf]
  %v1898 = vld [vmem:[%s7 + $0x30] sm:$0xf]
  %v1899 = vld [vmem:[%s7 + $0x34] sm:$0xf]
  %v1900 = vld [vmem:[%s7 + $0x38] sm:$0xf]
  %v1901 = vld [vmem:[%s7 + $0x3c] sm:$0xf]
  %v1902 = vpack.c.bf16 %v1871, %v1870
  %v1903 = vpack.c.bf16 %v1873, %v1872
  %v1904 = vpack.c.bf16 %v1875, %v1874
  %v1905 = vpack.c.bf16 %v1877, %v1876
  %v1906 = vpack.c.bf16 %v1879, %v1878
  %v1907 = vpack.c.bf16 %v1881, %v1880
  %v1908 = vpack.c.bf16 %v1883, %v1882
  %v1909 = vpack.c.bf16 %v1885, %v1884
  %v1910 = vld [vmem:[%s8] sm:$0xff]
  %v1911 = vld [vmem:[%s8 + $0x8] sm:$0xff]
  %v1912 = vld [vmem:[%s8 + $0x10] sm:$0xff]
  %v1913 = vld [vmem:[%s8 + $0x18] sm:$0xff]
  %v1914 = vld [vmem:[%s8 + $0x20] sm:$0xff]
  %v1915 = vld [vmem:[%s8 + $0x28] sm:$0xff]
  %v1916 = vld [vmem:[%s8 + $0x30] sm:$0xff]
  %v1917 = vld [vmem:[%s8 + $0x38] sm:$0xff]
  %v1918 = vld [vmem:[%s8 + $0x40] sm:$0xff]
  %v1919 = vld [vmem:[%s8 + $0x48] sm:$0xff]
  %v1920 = vld [vmem:[%s8 + $0x50] sm:$0xff]
  %v1921 = vld [vmem:[%s8 + $0x58] sm:$0xff]
  %v1922 = vld [vmem:[%s8 + $0x60] sm:$0xff]
  %v1923 = vld [vmem:[%s8 + $0x68] sm:$0xff]
  %v1924 = vld [vmem:[%s8 + $0x70] sm:$0xff]
  %v1925 = vld [vmem:[%s8 + $0x78] sm:$0xff]
  %1927 = vset.pattern.permute.xlu0 0
  %1928 = vperm.xlu0 %1927, %v1910
  %v1929 = vpop.permute.xlu0 %1928
  %1932 = vset.pattern.permute.xlu0 0
  %1933 = vperm.xlu0 %1932, %v1911
  %v1934 = vpop.permute.xlu0 %1933
  %1937 = vset.pattern.permute.xlu0 0
  %1938 = vperm.xlu0 %1937, %v1912
  %v1939 = vpop.permute.xlu0 %1938
  %1942 = vset.pattern.permute.xlu0 0
  %1943 = vperm.xlu0 %1942, %v1913
  %v1944 = vpop.permute.xlu0 %1943
  %1947 = vset.pattern.permute.xlu0 0
  %1948 = vperm.xlu0 %1947, %v1914
  %v1949 = vpop.permute.xlu0 %1948
  %1952 = vset.pattern.permute.xlu0 0
  %1953 = vperm.xlu0 %1952, %v1915
  %v1954 = vpop.permute.xlu0 %1953
  %1957 = vset.pattern.permute.xlu0 0
  %1958 = vperm.xlu0 %1957, %v1916
  %v1959 = vpop.permute.xlu0 %1958
  %1962 = vset.pattern.permute.xlu0 0
  %1963 = vperm.xlu0 %1962, %v1917
  %v1964 = vpop.permute.xlu0 %1963
  %1967 = vset.pattern.permute.xlu0 0
  %1968 = vperm.xlu0 %1967, %v1918
  %v1969 = vpop.permute.xlu0 %1968
  %1972 = vset.pattern.permute.xlu0 0
  %1973 = vperm.xlu0 %1972, %v1919
  %v1974 = vpop.permute.xlu0 %1973
  %1977 = vset.pattern.permute.xlu0 0
  %1978 = vperm.xlu0 %1977, %v1920
  %v1979 = vpop.permute.xlu0 %1978
  %1982 = vset.pattern.permute.xlu0 0
  %1983 = vperm.xlu0 %1982, %v1921
  %v1984 = vpop.permute.xlu0 %1983
  %1987 = vset.pattern.permute.xlu0 0
  %1988 = vperm.xlu0 %1987, %v1922
  %v1989 = vpop.permute.xlu0 %1988
  %1992 = vset.pattern.permute.xlu0 0
  %1993 = vperm.xlu0 %1992, %v1923
  %v1994 = vpop.permute.xlu0 %1993
  %1997 = vset.pattern.permute.xlu0 0
  %1998 = vperm.xlu0 %1997, %v1924
  %v1999 = vpop.permute.xlu0 %1998
  %2002 = vset.pattern.permute.xlu0 0
  %2003 = vperm.xlu0 %2002, %v1925
  %v2004 = vpop.permute.xlu0 %2003
  %v2022 = vunpack.c.l.b16 %v1886
  %v2023 = vunpack.c.l.b16 %v1887
  %v2024 = vunpack.c.l.b16 %v1888
  %v2025 = vunpack.c.l.b16 %v1889
  %v2026 = vunpack.c.l.b16 %v1890
  %v2027 = vunpack.c.l.b16 %v1891
  %v2028 = vunpack.c.l.b16 %v1892
  %v2029 = vunpack.c.l.b16 %v1893
  %v2030 = vunpack.c.l.b16 %v1894
  %v2031 = vunpack.c.l.b16 %v1895
  %v2032 = vunpack.c.l.b16 %v1896
  %v2033 = vunpack.c.l.b16 %v1897
  %v2034 = vunpack.c.l.b16 %v1898
  %v2035 = vunpack.c.l.b16 %v1899
  %v2036 = vunpack.c.l.b16 %v1900
  %v2037 = vunpack.c.l.b16 %v1901
  %v2038 = vpack.c.b16 %v2023, %v2022
  %v2039 = vpack.c.b16 %v2025, %v2024
  %v2040 = vpack.c.b16 %v2027, %v2026
  %v2041 = vpack.c.b16 %v2029, %v2028
  %v2042 = vpack.c.b16 %v2031, %v2030
  %v2043 = vpack.c.b16 %v2033, %v2032
  %v2044 = vpack.c.b16 %v2035, %v2034
  %v2045 = vpack.c.b16 %v2037, %v2036
  %2054 = vmatprep.subr.bf16.mxu0 0
  %2055 = vmatpush1.bf16.msra.mxu0 %v1909
  %2056 = vmatprep.subr.bf16.mxu0 0
  %2057 = vmatpush1.bf16.msra.mxu0 %v1908
  %2058 = vmatprep.subr.bf16.mxu0 0
  %2059 = vmatpush1.bf16.msra.mxu0 %v1907
  %2060 = vmatprep.subr.bf16.mxu0 0
  %2061 = vmatpush1.bf16.msra.mxu0 %v1906
  %2062 = vmatprep.subr.bf16.mxu0 0
  %2063 = vmatpush1.bf16.msra.mxu0 %v1905
  %2064 = vmatprep.subr.bf16.mxu0 0
  %2065 = vmatpush1.bf16.msra.mxu0 %v1904
  %2066 = vmatprep.subr.bf16.mxu0 0
  %2067 = vmatpush1.bf16.msra.mxu0 %v1903
  %2068 = vmatprep.subr.bf16.mxu0 0
  %2069 = vmatpush1.bf16.msra.mxu0 %v1902
  %2070 = vmatprep.subr.bf16.mxu0 0
  %2071 = vmatpush2.bf16.msra.mxu0 0
  %2072 = vmatprep.subr.bf16.mxu0 0
  %2073 = vmatpush2.bf16.msra.mxu0 0
  %2074 = vmatprep.subr.bf16.mxu0 0
  %2075 = vmatpush2.bf16.msra.mxu0 0
  %2076 = vmatprep.subr.bf16.mxu0 0
  %2077 = vmatpush2.bf16.msra.mxu0 0
  %2078 = vmatprep.subr.bf16.mxu0 0
  %2079 = vmatpush2.bf16.msra.mxu0 0
  %2080 = vmatprep.subr.bf16.mxu0 0
  %2081 = vmatpush2.bf16.msra.mxu0 0
  %2082 = vmatprep.subr.bf16.mxu0 0
  %2083 = vmatpush2.bf16.msra.mxu0 0
  %2084 = vmatprep.subr.bf16.mxu0 0
  %2085 = vmatpush2.bf16.msra.mxu0 0
  %2086 = vmatprep.mubr.bf16.mxu0 0
  %2087 = vmatmul.mubr.bf16.gmra.mxu0 %v2038
  %v2088 = vpop.f32.mrf.mxu0
  %v2089 = vadd.f32 %v1929, %v2088
  %v2090 = vpop.f32.mrf.mxu0
  %v2091 = vpop.f32.mrf.mxu0
  %v2092 = vadd.f32 %v1934, %v2091
  %v2093 = vpop.f32.mrf.mxu0
  %2094 = vmatprep.mubr.bf16.mxu0 0
  %2095 = vmatmul.mubr.bf16.gmra.mxu0 %v2039
  %v2096 = vpop.f32.mrf.mxu0
  %v2097 = vadd.f32 %v1939, %v2096
  %v2098 = vpop.f32.mrf.mxu0
  %v2099 = vpop.f32.mrf.mxu0
  %v2100 = vadd.f32 %v1944, %v2099
  %v2101 = vpop.f32.mrf.mxu0
  %2102 = vmatprep.mubr.bf16.mxu0 0
  %2103 = vmatmul.mubr.bf16.gmra.mxu0 %v2040
  %v2104 = vpop.f32.mrf.mxu0
  %v2105 = vadd.f32 %v1949, %v2104
  %v2106 = vpop.f32.mrf.mxu0
  %v2107 = vpop.f32.mrf.mxu0
  %v2108 = vadd.f32 %v1954, %v2107
  %v2109 = vpop.f32.mrf.mxu0
  %2110 = vmatprep.mubr.bf16.mxu0 0
  %2111 = vmatmul.mubr.bf16.gmra.mxu0 %v2041
  %v2112 = vpop.f32.mrf.mxu0
  %v2113 = vadd.f32 %v1959, %v2112
  %v2114 = vpop.f32.mrf.mxu0
  %v2115 = vpop.f32.mrf.mxu0
  %v2116 = vadd.f32 %v1964, %v2115
  %v2117 = vpop.f32.mrf.mxu0
  %2118 = vmatprep.mubr.bf16.mxu0 0
  %2119 = vmatmul.mubr.bf16.gmra.mxu0 %v2042
  %v2120 = vpop.f32.mrf.mxu0
  %v2121 = vadd.f32 %v1969, %v2120
  %v2122 = vpop.f32.mrf.mxu0
  %v2123 = vpop.f32.mrf.mxu0
  %v2124 = vadd.f32 %v1974, %v2123
  %v2125 = vpop.f32.mrf.mxu0
  %2126 = vmatprep.mubr.bf16.mxu0 0
  %2127 = vmatmul.mubr.bf16.gmra.mxu0 %v2043
  %v2128 = vpop.f32.mrf.mxu0
  %v2129 = vadd.f32 %v1979, %v2128
  %v2130 = vpop.f32.mrf.mxu0
  %v2131 = vpop.f32.mrf.mxu0
  %v2132 = vadd.f32 %v1984, %v2131
  %v2133 = vpop.f32.mrf.mxu0
  %2134 = vmatprep.mubr.bf16.mxu0 0
  %2135 = vmatmul.mubr.bf16.gmra.mxu0 %v2044
  %v2136 = vpop.f32.mrf.mxu0
  %v2137 = vadd.f32 %v1989, %v2136
  %v2138 = vpop.f32.mrf.mxu0
  %v2139 = vpop.f32.mrf.mxu0
  %v2140 = vadd.f32 %v1994, %v2139
  %v2141 = vpop.f32.mrf.mxu0
  %2142 = vmatprep.mubr.bf16.mxu0 0
  %2143 = vmatmul.mubr.bf16.gmra.mxu0 %v2045
  %v2144 = vpop.f32.mrf.mxu0
  %v2145 = vadd.f32 %v1999, %v2144
  %v2146 = vpop.f32.mrf.mxu0
  %v2147 = vpop.f32.mrf.mxu0
  %v2148 = vadd.f32 %v2004, %v2147
  %v2149 = vpop.f32.mrf.mxu0
  %2150 = vdwg.mxu0
  %v2151 = vmax.f32 %v2089, 0.0
  %v2152 = vmax.f32 %v2092, 0.0
  %v2153 = vmax.f32 %v2097, 0.0
  %v2154 = vmax.f32 %v2100, 0.0
  %v2155 = vmax.f32 %v2105, 0.0
  %v2156 = vmax.f32 %v2108, 0.0
  %v2157 = vmax.f32 %v2113, 0.0
  %v2158 = vmax.f32 %v2116, 0.0
  %v2159 = vmax.f32 %v2121, 0.0
  %v2160 = vmax.f32 %v2124, 0.0
  %v2161 = vmax.f32 %v2129, 0.0
  %v2162 = vmax.f32 %v2132, 0.0
  %v2163 = vmax.f32 %v2137, 0.0
  %v2164 = vmax.f32 %v2140, 0.0
  %v2165 = vmax.f32 %v2145, 0.0
  %v2166 = vmax.f32 %v2148, 0.0
  %v2167 = vld [vmem:[%s9] sm:$0xf]
  %v2168 = vld [vmem:[%s9 + $0x4] sm:$0x1]
  %v2169 = vpack.c.bf16 %v2152, %v2151
  %v2170 = vpack.c.bf16 %v2154, %v2153
  %v2171 = vpack.c.bf16 %v2156, %v2155
  %v2172 = vpack.c.bf16 %v2158, %v2157
  %v2173 = vpack.c.bf16 %v2160, %v2159
  %v2174 = vpack.c.bf16 %v2162, %v2161
  %v2175 = vpack.c.bf16 %v2164, %v2163
  %v2176 = vpack.c.bf16 %v2166, %v2165
  %v2177 = vld [vmem:[%s10] sm:$0xff]
  %v2178 = vld [vmem:[%s10 + $0x8] sm:$0x3]
  %2180 = vset.pattern.permute.xlu0 0
  %2181 = vperm.xlu0 %2180, %v2177
  %v2182 = vpop.permute.xlu0 %2181
  %2185 = vset.pattern.permute.xlu0 0
  %2186 = vperm.xlu0 %2185, %v2178
  %v2187 = vpop.permute.xlu0 %2186
  %v2191 = vunpack.c.l.b16 %v2167
  %v2192 = vunpack.c.l.b16 %v2168
  %v2193 = vpack.c.b16 %v2192, %v2191
  %2195 = vmatprep.subr.bf16.mxu0 0
  %2196 = vmatpush1.bf16.msra.mxu0 %v2176
  %2197 = vmatprep.subr.bf16.mxu0 0
  %2198 = vmatpush1.bf16.msra.mxu0 %v2175
  %2199 = vmatprep.subr.bf16.mxu0 0
  %2200 = vmatpush1.bf16.msra.mxu0 %v2174
  %2201 = vmatprep.subr.bf16.mxu0 0
  %2202 = vmatpush1.bf16.msra.mxu0 %v2173
  %2203 = vmatprep.subr.bf16.mxu0 0
  %2204 = vmatpush1.bf16.msra.mxu0 %v2172
  %2205 = vmatprep.subr.bf16.mxu0 0
  %2206 = vmatpush1.bf16.msra.mxu0 %v2171
  %2207 = vmatprep.subr.bf16.mxu0 0
  %2208 = vmatpush1.bf16.msra.mxu0 %v2170
  %2209 = vmatprep.subr.bf16.mxu0 0
  %2210 = vmatpush1.bf16.msra.mxu0 %v2169
  %2211 = vmatprep.subr.bf16.mxu0 0
  %2212 = vmatpush2.bf16.msra.mxu0 0
  %2213 = vmatprep.subr.bf16.mxu0 0
  %2214 = vmatpush2.bf16.msra.mxu0 0
  %2215 = vmatprep.subr.bf16.mxu0 0
  %2216 = vmatpush2.bf16.msra.mxu0 0
  %2217 = vmatprep.subr.bf16.mxu0 0
  %2218 = vmatpush2.bf16.msra.mxu0 0
  %2219 = vmatprep.subr.bf16.mxu0 0
  %2220 = vmatpush2.bf16.msra.mxu0 0
  %2221 = vmatprep.subr.bf16.mxu0 0
  %2222 = vmatpush2.bf16.msra.mxu0 0
  %2223 = vmatprep.subr.bf16.mxu0 0
  %2224 = vmatpush2.bf16.msra.mxu0 0
  %2225 = vmatprep.subr.bf16.mxu0 0
  %2226 = vmatpush2.bf16.msra.mxu0 0
  %2227 = vmatprep.mubr.bf16.mxu0 0
  %2228 = vmatmul.mubr.bf16.gmra.mxu0 %v2193
  %v2229 = vpop.f32.mrf.mxu0
  %v2230 = vadd.f32 %v2182, %v2229
  %v2231 = vpop.f32.mrf.mxu0
  %v2232 = vpop.f32.mrf.mxu0
  %v2233 = vadd.f32 %v2187, %v2232
  %v2234 = vpop.f32.mrf.mxu0
  %2235 = vdwg.mxu0
  %vm2236 = vcmask 15360
  %v2237 = vsel %vm2236, %v2230, -inf
  %vm2238 = vcmask 9216
  %v2239 = vsel %vm2238, %v2233, -inf
  %v2240 = vmax.f32 %v2237, %v2239
  %v2241 = vrot.slane %v2240, 4
  %v2242 = vmax.f32 %v2240, %v2241
  %v2243 = vrot.slane %v2242, 2
  %v2244 = vmax.f32 %v2242, %v2243
  %v2245 = vrot.slane %v2244, 1
  %v2246 = vmax.f32 %v2244, %v2245
  %v2247 = vsub.f32 %v2230, %v2246
  %v2248 = vsub.f32 %v2233, %v2246
  %v2249 = vmul.f32 %v2247, 1.442695
  %v2250 = vpow.pop %v2249
  %v2251 = vmul.f32 %v2248, 1.442695
  %v2252 = vpow.pop %v2251
  %v2253 = vsel %vm2236, %v2250, 0.0
  %v2254 = vsel %vm2238, %v2252, 0.0
  %v2255 = vadd.f32 %v2253, %v2254
  %v2256 = vrot.slane %v2255, 4
  %v2257 = vadd.f32 %v2255, %v2256
  %v2258 = vrot.slane %v2257, 2
  %v2259 = vadd.f32 %v2257, %v2258
  %v2260 = vrot.slane %v2259, 1
  %v2261 = vadd.f32 %v2259, %v2260
  %v2262 = vrcp.pop %v2261
  %v2263 = vmul.f32 %v2250, %v2262
  %v2264 = vmul.f32 %v2252, %v2262
  %2265 = vst.msk [vmem:[%s11] sm:$0xff] %vm2236, %v2263
  %2266 = vst.msk [vmem:[%s11 + $0x8] sm:$0x3] %vm2238, %v2264
  // Predicated region
  $region46: #{net_forward.1} parent=0 // pred_check
    _
  $region47: #{net_forward.1} parent=0 // pred_check_branch
    %2268 = sbr.rel (0) target = $region49
  $region48: #{net_forward.1} parent=0 // pred_region
    _
  $region49: #{net_forward.1} parent=0 // pred_fallthru
    _
  // Predicated region
  $region50: #{net_forward.1} parent=0 // pred_check
    _
  $region51: #{net_forward.1} parent=0 // pred_check_branch
    %2270 = sbr.rel (0) target = $region53
  $region52: #{net_forward.1} parent=0 // pred_region
    _
  $region53: #{net_forward.1} parent=0 // pred_fallthru
    _

</llo_original>
